<compile_context>
chip_gen: v6e
topology: v6e:2x2x1
jax: 0.10.0
libtpu: 0.0.40
codegen_flags: <defaults>
</compile_context>

<pallas_src>
import jax
import jax.numpy as jnp
from jax.experimental import pallas as pl
from jax.experimental.pallas import tpu as pltpu

FACTOR = 1.0  # TODO(synk): `factor` is an undefined global in the reference module; using 1.0
HIDDEN = 128  # LSTM hidden size (module __init__ default)
B = 8         # batch
L = 5         # input seq length implied by fc1 = Linear(2 * hidden, 128) -> T after convs = 2


def physical_lstm2_kernel(
    x_ref,      # (TB, 8)    bf16   input samples (lanes 0..3 valid)
    w1_ref,     # (8, 256)   bf16   conv1 banded weight (BN1 scale folded), rows 4..7 zero
    w2_ref,     # (256, 256) bf16   conv2 block-banded weight (BN2 scale folded)
    wb_ref,     # (640, 512) bf16   [conv3 band (BN3 folded); LSTM W_ih^T; LSTM W_hh^T]
    wfc_ref,    # (512, 128) bf16   [fc1 (BN4 folded); fc2 (padded, BN5 folded); fc3 (padded)]
    b_ref,      # (8, 512)   f32    shift/bias rows (BN shifts include conv/fc biases)
    o_ref,      # (TB, 128)  f32    output, lanes 0..1 valid
):
    f32, bf16 = jnp.float32, jnp.bfloat16
    relu = lambda v: jnp.maximum(v, 0.0)
    tb = x_ref.shape[0]
    H = HIDDEN

    def mm(a, b):  # bf16 MXU matmul with f32 accumulation
        return jnp.dot(a.astype(bf16), b, preferred_element_type=f32)

    # ---- conv1 + BN1 + ReLU: banded matmul, K=8 (zero rows trimmed) -> (TB, 4*64) ----
    h1 = relu(mm(x_ref[...], w1_ref[...]) + b_ref[0:1, 0:256])
    # ---- conv2 + BN2 + ReLU: block-banded matmul -> (TB, 2*128) = [t0 | t1] ----
    h2 = relu(mm(h1, w2_ref[...]) + b_ref[1:2, 0:256])
    # ---- conv3 + BN3 + ReLU: both timesteps share the LHS -> (TB, 2*256) = [t0 | t1] ----
    h3 = relu(mm(h2, wb_ref[0:256, :]) + b_ref[2:3, :])

    # ---- LSTM(256 -> 128), 2 steps, h0 = c0 = 0 ----
    # Input projections for both steps in one stacked matmul: (2*TB, 256) @ (256, 4H).
    # Stack in bf16 so the only cross-lane/sublane reshuffle moves half the vregs.
    h3b = h3.astype(bf16)
    gx = mm(jnp.concatenate([h3b[:, 0:256], h3b[:, 256:512]], axis=0), wb_ref[256:512, :])
    lb = b_ref[3:4, :]

    # step 0: h0 = c0 = 0 -> skip the recurrent matmul and the forget-gate term
    g0 = gx[:tb] + lb
    c = jax.nn.sigmoid(g0[:, 0:H]) * jnp.tanh(g0[:, 2 * H:3 * H])
    h_t0 = jax.nn.sigmoid(g0[:, 3 * H:4 * H]) * jnp.tanh(c)
    # step 1: single recurrent matmul on the critical path
    g1 = gx[tb:] + mm(h_t0, wb_ref[512:640, :]) + lb
    c = (jax.nn.sigmoid(g1[:, H:2 * H]) * c
         + jax.nn.sigmoid(g1[:, 0:H]) * jnp.tanh(g1[:, 2 * H:3 * H]))
    h_t1 = jax.nn.sigmoid(g1[:, 3 * H:4 * H]) * jnp.tanh(c)
    # TODO(synk): on v6e/v7x the gate nonlinearities could run in bf16 (EUP bf16 path);
    # kept f32 here for v5e portability and accuracy headroom.

    # ---- fc1 + BN4 + ReLU: single K=256 matmul on the lane-concatenated LSTM outputs ----
    hcat = jnp.concatenate([h_t0.astype(bf16), h_t1.astype(bf16)], axis=-1)  # 128-lane aligned
    z = relu(mm(hcat, wfc_ref[0:256, :]) + b_ref[4:5, 0:128])
    # ---- fc2 + BN5 + ReLU (lanes 64..127 are zero-padded) ----
    z = relu(mm(z, wfc_ref[256:384, :]) + b_ref[5:6, 0:128])
    # ---- fc3 + sigmoid * factor (padded to 128 lanes; wrapper keeps [:, :2]) ----
    z = mm(z, wfc_ref[384:512, :]) + b_ref[6:7, 0:128]
    o_ref[...] = jax.nn.sigmoid(z) * FACTOR


# ---------------------------------------------------------------------------
# Plain-JAX glue: deterministic parameter init, folding/packing, wrapper, reference
# ---------------------------------------------------------------------------

def _round_up(n, m):
    return ((n + m - 1) // m) * m


def build_raw_params(key):
    ks = iter(jax.random.split(key, 40))
    nrm = lambda shape, scale=0.1: scale * jax.random.normal(next(ks), shape, jnp.float32)
    p = {}
    p['conv1_w'] = nrm((64, 1, 3));    p['conv1_b'] = nrm((64,))
    p['conv2_w'] = nrm((128, 64, 3));  p['conv2_b'] = nrm((128,))
    p['conv3_w'] = nrm((256, 128, 3)); p['conv3_b'] = nrm((256,))
    for name, c in (('bn1', 64), ('bn2', 128), ('bn3', 256), ('bn4', 128), ('bn5', 64)):
        p[name + '_g'] = 1.0 + nrm((c,))
        p[name + '_b'] = nrm((c,))
        p[name + '_m'] = nrm((c,))
        p[name + '_v'] = 1.0 + jnp.abs(nrm((c,)))
    p['lstm_wih'] = nrm((4 * HIDDEN, 256))
    p['lstm_whh'] = nrm((4 * HIDDEN, HIDDEN))
    p['lstm_bih'] = nrm((4 * HIDDEN,))
    p['lstm_bhh'] = nrm((4 * HIDDEN,))
    p['fc1_w'] = nrm((128, 2 * HIDDEN)); p['fc1_b'] = nrm((128,))
    p['fc2_w'] = nrm((64, 128));         p['fc2_b'] = nrm((64,))
    p['fc3_w'] = nrm((2, 64));           p['fc3_b'] = nrm((2,))
    return p


def fold_kernel_operands(p, eps=1e-5):
    """Fold BN(eval) scales into weights, build banded conv weights, pack into 5 slabs."""
    f32, bf16 = jnp.float32, jnp.bfloat16

    def bn_fold(pre, bias):
        scale = p[pre + '_g'] / jnp.sqrt(p[pre + '_v'] + eps)
        shift = (bias - p[pre + '_m']) * scale + p[pre + '_b']
        return scale, shift

    s1, t1 = bn_fold('bn1', p['conv1_b'])
    s2, t2 = bn_fold('bn2', p['conv2_b'])
    s3, t3 = bn_fold('bn3', p['conv3_b'])
    s4, t4 = bn_fold('bn4', p['fc1_b'])
    s5, t5 = bn_fold('bn5', p['fc2_b'])

    # conv1 (k=3, pad=1, len 4 -> 4) as a banded (8, 4*64) weight (rows 4..7 zero).
    w1 = p['conv1_w'][:, 0, :]                               # (64, 3)  [cout, tap]
    w1_band = jnp.zeros((8, 4 * 64), f32)
    for t in range(4):
        for k in range(3):
            src = t + k - 1
            if 0 <= src < 4:
                w1_band = w1_band.at[src, t * 64:(t + 1) * 64].set(w1[:, k] * s1)

    # conv2 (k=3, no pad, len 4 -> 2) as a block-banded (4*64, 2*128) weight.
    w2 = p['conv2_w']                                        # (128, 64, 3)
    w2_band = jnp.zeros((4 * 64, 2 * 128), f32)
    for t in range(2):
        for k in range(3):
            src = t + k
            w2_band = w2_band.at[src * 64:(src + 1) * 64, t * 128:(t + 1) * 128].set(
                (w2[:, :, k] * s2[:, None]).T)

    # conv3 (k=3, pad=1, len 2 -> 2): both outputs use LHS [h2_t0 | h2_t1] -> (2*128, 2*256).
    w3 = p['conv3_w']                                        # (256, 128, 3)
    w3t = [(w3[:, :, k] * s3[:, None]).T for k in range(3)]  # (128, 256) each, BN3 folded
    w3_big = jnp.concatenate(
        [jnp.concatenate([w3t[1], w3t[2]], axis=0),
         jnp.concatenate([w3t[0], w3t[1]], axis=0)], axis=1)  # (256, 512)

    # big (640, 512) bf16 blob: conv3 band, LSTM W_ih^T, LSTM W_hh^T
    wb = jnp.concatenate([w3_big, p['lstm_wih'].T, p['lstm_whh'].T], axis=0).astype(bf16)

    # (512, 128) bf16 blob for the FC head: fc1 (K=256), fc2/fc3 lane-padded to 128
    fw1 = p['fc1_w'].T * s4[None, :]                         # (256, 128), BN4 folded
    fw2 = jnp.zeros((128, 128), f32).at[:, :64].set(p['fc2_w'].T * s5[None, :])
    fw3 = jnp.zeros((128, 128), f32).at[:64, :2].set(p['fc3_w'].T)
    wfc = jnp.concatenate([fw1, fw2, fw3], axis=0).astype(bf16)

    # (8, 512) f32 shift/bias blob; BN shifts already include the conv/fc biases.
    def row(v):
        return jnp.zeros((512,), f32).at[:v.shape[0]].set(v)
    bias = jnp.stack([
        row(jnp.tile(t1, 4)),                                # conv1+bn1 shift (per time slab)
        row(jnp.tile(t2, 2)),                                # conv2+bn2 shift
        row(jnp.tile(t3, 2)),                                # conv3+bn3 shift
        row(p['lstm_bih'] + p['lstm_bhh']),                  # LSTM bias
        row(t4),                                             # fc1+bn4 shift
        row(t5),                                             # fc2+bn5 shift (lanes 64.. zero)
        row(p['fc3_b']),                                     # fc3 bias (lanes 2.. zero)
        jnp.zeros((512,), f32),                              # pad to 8 sublanes
    ])
    return (w1_band.astype(bf16), w2_band.astype(bf16), wb, wfc, bias)


def _cost_estimate(b_pad):
    """Advisory CostEstimate for the whole call (helps XLA schedule around a us-scale kernel)."""
    per_row_matmul_flops = 2 * (8 * 256 + 256 * 256 + 256 * 512 + 2 * 256 * 512
                                + 128 * 512 + 256 * 128 + 128 * 128 + 128 * 128)
    weight_bytes = (8 * 256 + 256 * 256 + 640 * 512 + 512 * 128) * 2 + 8 * 512 * 4
    io_bytes = b_pad * 8 * 2 + b_pad * 128 * 4
    return pl.CostEstimate(
        flops=int(b_pad * per_row_matmul_flops),
        transcendentals=int(b_pad * 11 * 128),               # LSTM gates + final sigmoid
        bytes_accessed=int(weight_bytes + io_bytes),
    )


@jax.jit
def physical_lstm2_pallas(x, ops):
    bsz = x.shape[0]
    yd = x[:, 0, -1].reshape(bsz, 1)
    time = x[:, 0, 0]

    # Batch tiling: large tiles amortize the ~0.35 us per-grid-step overhead; weights are
    # pinned resident via constant index_maps so they are only DMA'd once per call.
    batch_tile = min(512, _round_up(bsz, 8))
    b_pad = _round_up(bsz, batch_tile)
    grid = (b_pad // batch_tile,)

    # conv1 LHS: 4 valid samples padded to 8 lanes, bf16 (halves input DMA, no in-kernel cast)
    x_in = jnp.zeros((b_pad, 8), jnp.bfloat16).at[:bsz, :L - 1].set(
        x[:, 0, :-1].astype(jnp.bfloat16))

    w1, w2, wb, wfc, bias = ops
    grid_spec = pltpu.PrefetchScalarGridSpec(
        num_scalar_prefetch=0,
        grid=grid,
        in_specs=[
            pl.BlockSpec((batch_tile, 8), lambda i: (i, 0)),      # input: tiled over batch
            pl.BlockSpec((8, 256), lambda i: (0, 0)),             # weights: resident in VMEM
            pl.BlockSpec((256, 256), lambda i: (0, 0)),
            pl.BlockSpec((640, 512), lambda i: (0, 0)),
            pl.BlockSpec((512, 128), lambda i: (0, 0)),
            pl.BlockSpec((8, 512), lambda i: (0, 0)),
        ],
        out_specs=pl.BlockSpec((batch_tile, 128), lambda i: (i, 0)),
    )
    out = pl.pallas_call(
        physical_lstm2_kernel,
        out_shape=jax.ShapeDtypeStruct((b_pad, 128), jnp.float32),
        grid_spec=grid_spec,
        compiler_params=pltpu.CompilerParams(
            dimension_semantics=("parallel",)),                   # megacore sharding on v7x
        cost_estimate=_cost_estimate(b_pad),
    )(x_in, w1, w2, wb, wfc, bias)
    return out[:bsz, :2], yd, time


def torch_like_forward(x, p, eps=1e-5):
    """Pure-JAX eval-mode reference mirroring the PyTorch module (f32 everywhere)."""
    relu = lambda v: jnp.maximum(v, 0.0)

    def bn_c(v, pre):  # (B, C, L)
        g, b, m, var = p[pre + '_g'], p[pre + '_b'], p[pre + '_m'], p[pre + '_v']
        return ((v - m[None, :, None]) / jnp.sqrt(var[None, :, None] + eps)
                * g[None, :, None] + b[None, :, None])

    def bn_f(v, pre):  # (B, C)
        g, b, m, var = p[pre + '_g'], p[pre + '_b'], p[pre + '_m'], p[pre + '_v']
        return (v - m) / jnp.sqrt(var + eps) * g + b

    def conv(v, w, b, pad):
        out = jax.lax.conv_general_dilated(
            v, w, window_strides=(1,), padding=[(pad, pad)],
            dimension_numbers=('NCH', 'OIH', 'NCH'))
        return out + b[None, :, None]

    bsz = x.shape[0]
    yd = x[:, 0, -1].reshape(bsz, 1)
    time = x[:, 0, 0]
    h = x[:, :, :-1]
    h = relu(bn_c(conv(h, p['conv1_w'], p['conv1_b'], 1), 'bn1'))
    h = relu(bn_c(conv(h, p['conv2_w'], p['conv2_b'], 0), 'bn2'))
    h = relu(bn_c(conv(h, p['conv3_w'], p['conv3_b'], 1), 'bn3'))
    seq = jnp.transpose(h, (0, 2, 1))                        # (B, 2, 256)
    hh = jnp.zeros((bsz, HIDDEN), jnp.float32)
    cc = jnp.zeros((bsz, HIDDEN), jnp.float32)
    outs = []
    for t in range(seq.shape[1]):
        gates = (seq[:, t] @ p['lstm_wih'].T + hh @ p['lstm_whh'].T
                 + p['lstm_bih'] + p['lstm_bhh'])
        i_g = jax.nn.sigmoid(gates[:, :HIDDEN])
        f_g = jax.nn.sigmoid(gates[:, HIDDEN:2 * HIDDEN])
        g_g = jnp.tanh(gates[:, 2 * HIDDEN:3 * HIDDEN])
        o_g = jax.nn.sigmoid(gates[:, 3 * HIDDEN:])
        cc = f_g * cc + i_g * g_g
        hh = o_g * jnp.tanh(cc)
        outs.append(hh)
    flat = jnp.concatenate(outs, axis=1)
    z = relu(bn_f(flat @ p['fc1_w'].T + p['fc1_b'], 'bn4'))
    z = relu(bn_f(z @ p['fc2_w'].T + p['fc2_b'], 'bn5'))
    z = jax.nn.sigmoid(z @ p['fc3_w'].T + p['fc3_b']) * FACTOR
    return z, yd, time


if __name__ == "__main__":
    key = jax.random.PRNGKey(0)
    kx, kp = jax.random.split(key)
    x = jax.random.normal(kx, (B, 1, L), jnp.float32)

    raw = build_raw_params(kp)
    ops = fold_kernel_operands(raw)

    out, yd, time = physical_lstm2_pallas(x, ops)
    jax.block_until_ready(out)

    ref_out, ref_yd, ref_time = torch_like_forward(x, raw)
    assert out.shape == (B, 2) and yd.shape == (B, 1) and time.shape == (B,)
    # bf16 matmul operands / bf16 input vs f32 reference -> relaxed tolerance
    assert jnp.allclose(out, ref_out, atol=3e-2, rtol=3e-2), "kernel mismatch vs reference"
    assert jnp.allclose(yd, ref_yd) and jnp.allclose(time, ref_time)

    print("KERNEL_OK")
</pallas_src>

<mosaic_0001>
module attributes {stable_mosaic.version = 11 : i64} {
  func.func @physical_lstm2_kernel(%arg0: i32, %arg1: memref<8x8xbf16, #tpu.memory_space<vmem>>, %arg2: memref<8x256xbf16, #tpu.memory_space<vmem>>, %arg3: memref<256x256xbf16, #tpu.memory_space<vmem>>, %arg4: memref<640x512xbf16, #tpu.memory_space<vmem>>, %arg5: memref<512x128xbf16, #tpu.memory_space<vmem>>, %arg6: memref<8x512xf32, #tpu.memory_space<vmem>>, %arg7: memref<8x128xf32, #tpu.memory_space<vmem>>) attributes {dimension_semantics = [#tpu.dimension_semantics<parallel>], iteration_bounds = array<i64: 1>, scalar_prefetch = 0 : i64, scratch_operands = 0 : i64, tpu.core_type = #tpu.core_type<tc>, window_params = [{transform_indices = @transform_0, window_bounds = array<i64: 8, 8>}, {pipeline_mode = #tpu.pipeline_mode<synchronous>, transform_indices = @transform_1, window_bounds = array<i64: 8, 256>}, {pipeline_mode = #tpu.pipeline_mode<synchronous>, transform_indices = @transform_2, window_bounds = array<i64: 256, 256>}, {pipeline_mode = #tpu.pipeline_mode<synchronous>, transform_indices = @transform_3, window_bounds = array<i64: 640, 512>}, {pipeline_mode = #tpu.pipeline_mode<synchronous>, transform_indices = @transform_4, window_bounds = array<i64: 512, 128>}, {pipeline_mode = #tpu.pipeline_mode<synchronous>, transform_indices = @transform_5, window_bounds = array<i64: 8, 512>}, {transform_indices = @transform_6, window_bounds = array<i64: 8, 128>}]} {
    %c0 = arith.constant 0 : index
    %c0_0 = arith.constant 0 : index
    %0 = vector.load %arg1[%c0, %c0_0] : memref<8x8xbf16, #tpu.memory_space<vmem>>, vector<8x8xbf16>
    %c0_1 = arith.constant 0 : index
    %c0_2 = arith.constant 0 : index
    %1 = vector.load %arg2[%c0_1, %c0_2] : memref<8x256xbf16, #tpu.memory_space<vmem>>, vector<8x256xbf16>
    %cst = arith.constant dense<0.000000e+00> : vector<8x256xf32>
    %2 = tpu.matmul %0, %1, %cst {dimension_numbers = #tpu.dot_dimension_numbers<[1], [0], [0], [1], [0, 0, 1, 1], [], []>} : vector<8x8xbf16>, vector<8x256xbf16>, vector<8x256xf32> -> vector<8x256xf32>
    %c0_3 = arith.constant 0 : index
    %c0_4 = arith.constant 0 : index
    %3 = vector.load %arg6[%c0_3, %c0_4] : memref<8x512xf32, #tpu.memory_space<vmem>>, vector<1x256xf32>
    %4 = vector.broadcast %3 : vector<1x256xf32> to vector<8x256xf32>
    %5 = arith.addf %2, %4 : vector<8x256xf32>
    %cst_5 = arith.constant 0.000000e+00 : f32
    %6 = vector.broadcast %cst_5 : f32 to vector<8x256xf32>
    %7 = arith.maximumf %5, %6 : vector<8x256xf32>
    %c0_6 = arith.constant 0 : index
    %c0_7 = arith.constant 0 : index
    %8 = vector.load %arg3[%c0_6, %c0_7] : memref<256x256xbf16, #tpu.memory_space<vmem>>, vector<256x256xbf16>
    %9 = arith.truncf %7 : vector<8x256xf32> to vector<8x256xbf16>
    %cst_8 = arith.constant dense<0.000000e+00> : vector<8x256xf32>
    %10 = tpu.matmul %9, %8, %cst_8 {dimension_numbers = #tpu.dot_dimension_numbers<[1], [0], [0], [1], [0, 0, 1, 1], [], []>} : vector<8x256xbf16>, vector<256x256xbf16>, vector<8x256xf32> -> vector<8x256xf32>
    %c1 = arith.constant 1 : index
    %c0_9 = arith.constant 0 : index
    %11 = vector.load %arg6[%c1, %c0_9] : memref<8x512xf32, #tpu.memory_space<vmem>>, vector<1x256xf32>
    %12 = vector.broadcast %11 : vector<1x256xf32> to vector<8x256xf32>
    %13 = arith.addf %10, %12 : vector<8x256xf32>
    %cst_10 = arith.constant 0.000000e+00 : f32
    %14 = vector.broadcast %cst_10 : f32 to vector<8x256xf32>
    %15 = arith.maximumf %13, %14 : vector<8x256xf32>
    %c0_11 = arith.constant 0 : index
    %c0_12 = arith.constant 0 : index
    %16 = vector.load %arg4[%c0_11, %c0_12] : memref<640x512xbf16, #tpu.memory_space<vmem>>, vector<256x512xbf16>
    %17 = arith.truncf %15 : vector<8x256xf32> to vector<8x256xbf16>
    %cst_13 = arith.constant dense<0.000000e+00> : vector<8x512xf32>
    %18 = tpu.matmul %17, %16, %cst_13 {dimension_numbers = #tpu.dot_dimension_numbers<[1], [0], [0], [1], [0, 0, 1, 1], [], []>} : vector<8x256xbf16>, vector<256x512xbf16>, vector<8x512xf32> -> vector<8x512xf32>
    %c2 = arith.constant 2 : index
    %c0_14 = arith.constant 0 : index
    %19 = vector.load %arg6[%c2, %c0_14] : memref<8x512xf32, #tpu.memory_space<vmem>>, vector<1x512xf32>
    %20 = vector.broadcast %19 : vector<1x512xf32> to vector<8x512xf32>
    %21 = arith.addf %18, %20 : vector<8x512xf32>
    %cst_15 = arith.constant 0.000000e+00 : f32
    %22 = vector.broadcast %cst_15 : f32 to vector<8x512xf32>
    %23 = arith.maximumf %21, %22 : vector<8x512xf32>
    %24 = arith.truncf %23 : vector<8x512xf32> to vector<8x512xbf16>
    %25 = vector.extract_strided_slice %24 {offsets = [0, 0], sizes = [8, 256], strides = [1, 1]} : vector<8x512xbf16> to vector<8x256xbf16>
    %26 = vector.extract_strided_slice %24 {offsets = [0, 256], sizes = [8, 256], strides = [1, 1]} : vector<8x512xbf16> to vector<8x256xbf16>
    %27 = tpu.concatenate %25, %26 in 0 : vector<8x256xbf16>, vector<8x256xbf16> -> vector<16x256xbf16>
    %c256 = arith.constant 256 : index
    %c0_16 = arith.constant 0 : index
    %28 = vector.load %arg4[%c256, %c0_16] : memref<640x512xbf16, #tpu.memory_space<vmem>>, vector<256x512xbf16>
    %cst_17 = arith.constant dense<0.000000e+00> : vector<16x512xf32>
    %29 = tpu.matmul %27, %28, %cst_17 {dimension_numbers = #tpu.dot_dimension_numbers<[1], [0], [0], [1], [0, 0, 1, 1], [], []>} : vector<16x256xbf16>, vector<256x512xbf16>, vector<16x512xf32> -> vector<16x512xf32>
    %c3 = arith.constant 3 : index
    %c0_18 = arith.constant 0 : index
    %30 = vector.load %arg6[%c3, %c0_18] : memref<8x512xf32, #tpu.memory_space<vmem>>, vector<1x512xf32>
    %31 = vector.extract_strided_slice %29 {offsets = [0, 0], sizes = [8, 512], strides = [1, 1]} : vector<16x512xf32> to vector<8x512xf32>
    %32 = vector.broadcast %30 : vector<1x512xf32> to vector<8x512xf32>
    %33 = arith.addf %31, %32 : vector<8x512xf32>
    %34 = vector.extract_strided_slice %33 {offsets = [0, 0], sizes = [8, 128], strides = [1, 1]} : vector<8x512xf32> to vector<8x128xf32>
    %35 = arith.negf %34 : vector<8x128xf32>
    %36 = math.exp %35 : vector<8x128xf32>
    %cst_19 = arith.constant 1.000000e+00 : f32
    %37 = vector.broadcast %cst_19 : f32 to vector<8x128xf32>
    %38 = arith.addf %37, %36 : vector<8x128xf32>
    %39 = arith.divf %37, %38 : vector<8x128xf32>
    %40 = vector.extract_strided_slice %33 {offsets = [0, 256], sizes = [8, 128], strides = [1, 1]} : vector<8x512xf32> to vector<8x128xf32>
    %41 = math.tanh %40 : vector<8x128xf32>
    %42 = arith.mulf %39, %41 : vector<8x128xf32>
    %43 = vector.extract_strided_slice %33 {offsets = [0, 384], sizes = [8, 128], strides = [1, 1]} : vector<8x512xf32> to vector<8x128xf32>
    %44 = arith.negf %43 : vector<8x128xf32>
    %45 = math.exp %44 : vector<8x128xf32>
    %cst_20 = arith.constant 1.000000e+00 : f32
    %46 = vector.broadcast %cst_20 : f32 to vector<8x128xf32>
    %47 = arith.addf %46, %45 : vector<8x128xf32>
    %48 = arith.divf %46, %47 : vector<8x128xf32>
    %49 = math.tanh %42 : vector<8x128xf32>
    %50 = arith.mulf %48, %49 : vector<8x128xf32>
    %51 = vector.extract_strided_slice %29 {offsets = [8, 0], sizes = [8, 512], strides = [1, 1]} : vector<16x512xf32> to vector<8x512xf32>
    %c512 = arith.constant 512 : index
    %c0_21 = arith.constant 0 : index
    %52 = vector.load %arg4[%c512, %c0_21] : memref<640x512xbf16, #tpu.memory_space<vmem>>, vector<128x512xbf16>
    %53 = arith.truncf %50 : vector<8x128xf32> to vector<8x128xbf16>
    %cst_22 = arith.constant dense<0.000000e+00> : vector<8x512xf32>
    %54 = tpu.matmul %53, %52, %cst_22 {dimension_numbers = #tpu.dot_dimension_numbers<[1], [0], [0], [1], [0, 0, 1, 1], [], []>} : vector<8x128xbf16>, vector<128x512xbf16>, vector<8x512xf32> -> vector<8x512xf32>
    %55 = arith.addf %51, %54 : vector<8x512xf32>
    %56 = vector.broadcast %30 : vector<1x512xf32> to vector<8x512xf32>
    %57 = arith.addf %55, %56 : vector<8x512xf32>
    %58 = vector.extract_strided_slice %57 {offsets = [0, 128], sizes = [8, 128], strides = [1, 1]} : vector<8x512xf32> to vector<8x128xf32>
    %59 = arith.negf %58 : vector<8x128xf32>
    %60 = math.exp %59 : vector<8x128xf32>
    %cst_23 = arith.constant 1.000000e+00 : f32
    %61 = vector.broadcast %cst_23 : f32 to vector<8x128xf32>
    %62 = arith.addf %61, %60 : vector<8x128xf32>
    %63 = arith.divf %61, %62 : vector<8x128xf32>
    %64 = arith.mulf %63, %42 : vector<8x128xf32>
    %65 = vector.extract_strided_slice %57 {offsets = [0, 0], sizes = [8, 128], strides = [1, 1]} : vector<8x512xf32> to vector<8x128xf32>
    %66 = arith.negf %65 : vector<8x128xf32>
    %67 = math.exp %66 : vector<8x128xf32>
    %cst_24 = arith.constant 1.000000e+00 : f32
    %68 = vector.broadcast %cst_24 : f32 to vector<8x128xf32>
    %69 = arith.addf %68, %67 : vector<8x128xf32>
    %70 = arith.divf %68, %69 : vector<8x128xf32>
    %71 = vector.extract_strided_slice %57 {offsets = [0, 256], sizes = [8, 128], strides = [1, 1]} : vector<8x512xf32> to vector<8x128xf32>
    %72 = math.tanh %71 : vector<8x128xf32>
    %73 = arith.mulf %70, %72 : vector<8x128xf32>
    %74 = arith.addf %64, %73 : vector<8x128xf32>
    %75 = vector.extract_strided_slice %57 {offsets = [0, 384], sizes = [8, 128], strides = [1, 1]} : vector<8x512xf32> to vector<8x128xf32>
    %76 = arith.negf %75 : vector<8x128xf32>
    %77 = math.exp %76 : vector<8x128xf32>
    %cst_25 = arith.constant 1.000000e+00 : f32
    %78 = vector.broadcast %cst_25 : f32 to vector<8x128xf32>
    %79 = arith.addf %78, %77 : vector<8x128xf32>
    %80 = arith.divf %78, %79 : vector<8x128xf32>
    %81 = math.tanh %74 : vector<8x128xf32>
    %82 = arith.mulf %80, %81 : vector<8x128xf32>
    %83 = arith.truncf %50 : vector<8x128xf32> to vector<8x128xbf16>
    %84 = arith.truncf %82 : vector<8x128xf32> to vector<8x128xbf16>
    %85 = tpu.concatenate %83, %84 in 1 : vector<8x128xbf16>, vector<8x128xbf16> -> vector<8x256xbf16>
    %c0_26 = arith.constant 0 : index
    %c0_27 = arith.constant 0 : index
    %86 = vector.load %arg5[%c0_26, %c0_27] : memref<512x128xbf16, #tpu.memory_space<vmem>>, vector<256x128xbf16>
    %cst_28 = arith.constant dense<0.000000e+00> : vector<8x128xf32>
    %87 = tpu.matmul %85, %86, %cst_28 {dimension_numbers = #tpu.dot_dimension_numbers<[1], [0], [0], [1], [0, 0, 1, 1], [], []>} : vector<8x256xbf16>, vector<256x128xbf16>, vector<8x128xf32> -> vector<8x128xf32>
    %c4 = arith.constant 4 : index
    %c0_29 = arith.constant 0 : index
    %88 = vector.load %arg6[%c4, %c0_29] : memref<8x512xf32, #tpu.memory_space<vmem>>, vector<1x128xf32>
    %89 = vector.broadcast %88 : vector<1x128xf32> to vector<8x128xf32>
    %90 = arith.addf %87, %89 : vector<8x128xf32>
    %cst_30 = arith.constant 0.000000e+00 : f32
    %91 = vector.broadcast %cst_30 : f32 to vector<8x128xf32>
    %92 = arith.maximumf %90, %91 : vector<8x128xf32>
    %c256_31 = arith.constant 256 : index
    %c0_32 = arith.constant 0 : index
    %93 = vector.load %arg5[%c256_31, %c0_32] : memref<512x128xbf16, #tpu.memory_space<vmem>>, vector<128x128xbf16>
    %94 = arith.truncf %92 : vector<8x128xf32> to vector<8x128xbf16>
    %cst_33 = arith.constant dense<0.000000e+00> : vector<8x128xf32>
    %95 = tpu.matmul %94, %93, %cst_33 {dimension_numbers = #tpu.dot_dimension_numbers<[1], [0], [0], [1], [0, 0, 1, 1], [], []>} : vector<8x128xbf16>, vector<128x128xbf16>, vector<8x128xf32> -> vector<8x128xf32>
    %c5 = arith.constant 5 : index
    %c0_34 = arith.constant 0 : index
    %96 = vector.load %arg6[%c5, %c0_34] : memref<8x512xf32, #tpu.memory_space<vmem>>, vector<1x128xf32>
    %97 = vector.broadcast %96 : vector<1x128xf32> to vector<8x128xf32>
    %98 = arith.addf %95, %97 : vector<8x128xf32>
    %cst_35 = arith.constant 0.000000e+00 : f32
    %99 = vector.broadcast %cst_35 : f32 to vector<8x128xf32>
    %100 = arith.maximumf %98, %99 : vector<8x128xf32>
    %c384 = arith.constant 384 : index
    %c0_36 = arith.constant 0 : index
    %101 = vector.load %arg5[%c384, %c0_36] : memref<512x128xbf16, #tpu.memory_space<vmem>>, vector<128x128xbf16>
    %102 = arith.truncf %100 : vector<8x128xf32> to vector<8x128xbf16>
    %cst_37 = arith.constant dense<0.000000e+00> : vector<8x128xf32>
    %103 = tpu.matmul %102, %101, %cst_37 {dimension_numbers = #tpu.dot_dimension_numbers<[1], [0], [0], [1], [0, 0, 1, 1], [], []>} : vector<8x128xbf16>, vector<128x128xbf16>, vector<8x128xf32> -> vector<8x128xf32>
    %c6 = arith.constant 6 : index
    %c0_38 = arith.constant 0 : index
    %104 = vector.load %arg6[%c6, %c0_38] : memref<8x512xf32, #tpu.memory_space<vmem>>, vector<1x128xf32>
    %105 = vector.broadcast %104 : vector<1x128xf32> to vector<8x128xf32>
    %106 = arith.addf %103, %105 : vector<8x128xf32>
    %107 = arith.negf %106 : vector<8x128xf32>
    %108 = math.exp %107 : vector<8x128xf32>
    %cst_39 = arith.constant 1.000000e+00 : f32
    %109 = vector.broadcast %cst_39 : f32 to vector<8x128xf32>
    %110 = arith.addf %109, %108 : vector<8x128xf32>
    %111 = arith.divf %109, %110 : vector<8x128xf32>
    %cst_40 = arith.constant 1.000000e+00 : f32
    %112 = vector.broadcast %cst_40 : f32 to vector<8x128xf32>
    %113 = arith.mulf %111, %112 : vector<8x128xf32>
    %c0_41 = arith.constant 0 : index
    %c0_42 = arith.constant 0 : index
    %114 = vector.load %arg7[%c0_41, %c0_42] : memref<8x128xf32, #tpu.memory_space<vmem>>, vector<8x128xf32>
    tpu.vector_store %arg7[%c0_41, %c0_42], %113 {strides = array<i32>} : memref<8x128xf32, #tpu.memory_space<vmem>>, vector<8x128xf32>,
    return
  }
  func.func @transform_0(%arg0: i32) -> (i32, i32) {
    %c0_i32 = arith.constant 0 : i32
    %c0_i32_0 = arith.constant 0 : i32
    return %arg0, %c0_i32 : i32, i32
  }
  func.func @transform_1(%arg0: i32) -> (i32, i32) {
    %c0_i32 = arith.constant 0 : i32
    %c0_i32_0 = arith.constant 0 : i32
    %c0_i32_1 = arith.constant 0 : i32
    return %c0_i32, %c0_i32_0 : i32, i32
  }
  func.func @transform_2(%arg0: i32) -> (i32, i32) {
    %c0_i32 = arith.constant 0 : i32
    %c0_i32_0 = arith.constant 0 : i32
    %c0_i32_1 = arith.constant 0 : i32
    return %c0_i32, %c0_i32_0 : i32, i32
  }
  func.func @transform_3(%arg0: i32) -> (i32, i32) {
    %c0_i32 = arith.constant 0 : i32
    %c0_i32_0 = arith.constant 0 : i32
    %c0_i32_1 = arith.constant 0 : i32
    return %c0_i32, %c0_i32_0 : i32, i32
  }
  func.func @transform_4(%arg0: i32) -> (i32, i32) {
    %c0_i32 = arith.constant 0 : i32
    %c0_i32_0 = arith.constant 0 : i32
    %c0_i32_1 = arith.constant 0 : i32
    return %c0_i32, %c0_i32_0 : i32, i32
  }
  func.func @transform_5(%arg0: i32) -> (i32, i32) {
    %c0_i32 = arith.constant 0 : i32
    %c0_i32_0 = arith.constant 0 : i32
    %c0_i32_1 = arith.constant 0 : i32
    return %c0_i32, %c0_i32_0 : i32, i32
  }
  func.func @transform_6(%arg0: i32) -> (i32, i32) {
    %c0_i32 = arith.constant 0 : i32
    %c0_i32_0 = arith.constant 0 : i32
    return %arg0, %c0_i32 : i32, i32
  }
}

</mosaic_0001>

<llo_original>
// kernel: physical_lstm2_pallas.1
$region0: #{physical_lstm2_pallas.1}
  #allocation0 [shape = 'u32[]', space=smem, size = 0x4, offset = 0x4, fixed_abs, tag = 'smem constant byte address 0x4 - core index']
  #allocation1 [shape = 'u32[144,128]{1,0:T(1,128)}', space=vmem, size = 0x12000, scoped, tag = 'internal scratch']
  %s0 = inlined_call_operand.vmem [shape: bf16[8,8], index: 0, kind: input, shape index: {}]
  %s1 = inlined_call_operand.vmem [shape: bf16[8,256], index: 1, kind: input, shape index: {}]
  %s2 = inlined_call_operand.hbm [shape: bf16[256,256], index: 2, kind: input, shape index: {}]
  %s3 = inlined_call_operand.hbm [shape: bf16[640,512], index: 3, kind: input, shape index: {}]
  %s4 = inlined_call_operand.hbm [shape: bf16[512,128], index: 4, kind: input, shape index: {}]
  %s5 = inlined_call_operand.hbm [shape: f32[8,512], index: 5, kind: input, shape index: {}]
  %s6 = inlined_call_operand.vmem [shape: f32[8,128], index: 6, kind: output, shape index: {}]
  %s7 = sld [smem:[#allocation0]]
  $region50: #{physical_lstm2_pallas.1} parent=0
    _
  %s9 = ssub.s32 1, %s7
  %s10 = scalar_select 0, %s9, %s7
  $region1: #{physical_lstm2_pallas.1} parent=0
    #allocation2 [shape = 'u8[131072]{0}', space=vmem, size = 0x20000, scoped, tag = 'input window, operand 2, single buffered']
    #allocation3 [shape = 's32[1]{0}', space=sflag, size = 0x4, scoped, tag = 'scoped memory for physical_lstm2_pallas.1']
    #allocation4 [shape = 'u8[655360]{0}', space=vmem, size = 0xa0000, scoped, tag = 'input window, operand 3, single buffered']
    #allocation5 [shape = 's32[1]{0}', space=sflag, size = 0x4, scoped, tag = 'scoped memory for physical_lstm2_pallas.1']
    #allocation6 [shape = 'u8[131072]{0}', space=vmem, size = 0x20000, scoped, tag = 'input window, operand 4, single buffered']
    #allocation7 [shape = 'u8[16384]{0}', space=vmem, size = 0x4000, scoped, tag = 'input window, operand 5, single buffered']
    #allocation8 [shape = 's32[1]{0}', space=sflag, size = 0x4, scoped, tag = 'scoped memory for physical_lstm2_pallas.1']
    %11 = vsyncpa [#allocation3], 0
    %12 = vsyncpa [#allocation5], 0
    %13 = vsyncpa [#allocation8], 0
    // Predicated region
    $region2: #{physical_lstm2_pallas.1} parent=1 // pred_check
      _
    $region3: #{physical_lstm2_pallas.1} parent=1 // pred_check_branch
      %15 = sbr.rel (0) target = $region5
    $region4: #{physical_lstm2_pallas.1} parent=1 // pred_region
      _
    $region5: #{physical_lstm2_pallas.1} parent=1 // pred_fallthru
      _
    // Predicated region
    $region6: #{physical_lstm2_pallas.1} parent=1 // pred_check
      _
    $region7: #{physical_lstm2_pallas.1} parent=1 // pred_check_branch
      %17 = sbr.rel (0) target = $region9
    $region8: #{physical_lstm2_pallas.1} parent=1 // pred_region
      _
    $region9: #{physical_lstm2_pallas.1} parent=1 // pred_fallthru
      _
    // Predicated region
    $region10: #{physical_lstm2_pallas.1} parent=1 // pred_check
      _
    $region11: #{physical_lstm2_pallas.1} parent=1 // pred_check_branch
      %19 = sbr.rel (0) target = $region13
    $region12: #{physical_lstm2_pallas.1} parent=1 // pred_region
      %s21 = ssub.s32 4096, 4096
      %22 = vsyncadd [#allocation3], %s21
      %s23 = sshll.u32 [#allocation2], 4
      %s24 = int_to_ptr.vmem [resolvable:$true] %s23
      %29 = dma.hbm_to_vmem [thread:$0]  %s2, 4096, %s24, [#allocation3], 128, 128, 8
    $region13: #{physical_lstm2_pallas.1} parent=1 // pred_fallthru
      _
    // Predicated region
    $region14: #{physical_lstm2_pallas.1} parent=1 // pred_check
      _
    $region15: #{physical_lstm2_pallas.1} parent=1 // pred_check_branch
      %31 = sbr.rel (0) target = $region17
    $region16: #{physical_lstm2_pallas.1} parent=1 // pred_region
      %s33 = ssub.s32 20480, 20480
      %34 = vsyncadd [#allocation5], %s33
      %s35 = sshll.u32 [#allocation4], 4
      %s36 = int_to_ptr.vmem [resolvable:$true] %s35
      %41 = dma.hbm_to_vmem [thread:$0]  %s3, 20480, %s36, [#allocation5], 256, 256, 16
    $region17: #{physical_lstm2_pallas.1} parent=1 // pred_fallthru
      _
    // Predicated region
    $region18: #{physical_lstm2_pallas.1} parent=1 // pred_check
      _
    $region19: #{physical_lstm2_pallas.1} parent=1 // pred_check_branch
      %43 = sbr.rel (0) target = $region21
    $region20: #{physical_lstm2_pallas.1} parent=1 // pred_region
      %s45 = ssub.s32 4096, 4096
      %46 = vsyncadd [#allocation5], %s45
      %s47 = sshll.u32 [#allocation6], 4
      %s48 = int_to_ptr.vmem [resolvable:$true] %s47
      %53 = dma.hbm_to_vmem [thread:$0]  %s4, 4096, %s48, [#allocation5], 64, 64, 4
    $region21: #{physical_lstm2_pallas.1} parent=1 // pred_fallthru
      _
    // Predicated region
    $region22: #{physical_lstm2_pallas.1} parent=1 // pred_check
      _
    $region23: #{physical_lstm2_pallas.1} parent=1 // pred_check_branch
      %55 = sbr.rel (0) target = $region25
    $region24: #{physical_lstm2_pallas.1} parent=1 // pred_region
      %s57 = ssub.s32 512, 512
      %58 = vsyncadd [#allocation8], %s57
      %s60 = sshll.u32 [#allocation7], 4
      %s61 = int_to_ptr.vmem [resolvable:$true] %s60
      %63 = dma.hbm_to_vmem [thread:$0]  %s5, 512, %s61, [#allocation8]
    $region25: #{physical_lstm2_pallas.1} parent=1 // pred_fallthru
      _
    // Predicated region
    $region26: #{physical_lstm2_pallas.1} parent=1 // pred_check
      _
    $region27: #{physical_lstm2_pallas.1} parent=1 // pred_check_branch
      %65 = sbr.rel (0) target = $region29
    $region28: #{physical_lstm2_pallas.1} parent=1 // pred_region
      %66 = dma.done [#allocation3], 4096
    $region29: #{physical_lstm2_pallas.1} parent=1 // pred_fallthru
      _
    // Predicated region
    $region30: #{physical_lstm2_pallas.1} parent=1 // pred_check
      _
    $region31: #{physical_lstm2_pallas.1} parent=1 // pred_check_branch
      %68 = sbr.rel (0) target = $region33
    $region32: #{physical_lstm2_pallas.1} parent=1 // pred_region
      %69 = dma.done [#allocation5], 20480
    $region33: #{physical_lstm2_pallas.1} parent=1 // pred_fallthru
      _
    // Predicated region
    $region34: #{physical_lstm2_pallas.1} parent=1 // pred_check
      _
    $region35: #{physical_lstm2_pallas.1} parent=1 // pred_check_branch
      %71 = sbr.rel (0) target = $region37
    $region36: #{physical_lstm2_pallas.1} parent=1 // pred_region
      %72 = dma.done [#allocation5], 4096
    $region37: #{physical_lstm2_pallas.1} parent=1 // pred_fallthru
      _
    // Predicated region
    $region38: #{physical_lstm2_pallas.1} parent=1 // pred_check
      _
    $region39: #{physical_lstm2_pallas.1} parent=1 // pred_check_branch
      %74 = sbr.rel (0) target = $region41
    $region40: #{physical_lstm2_pallas.1} parent=1 // pred_region
      %75 = dma.done [#allocation8], 512
    $region41: #{physical_lstm2_pallas.1} parent=1 // pred_fallthru
      _
    %v77 = vld [vmem:[%s0] sm:$0xf]
    %v78 = vld [vmem:[%s1] sm:$0xff]
    %v79 = vld [vmem:[#allocation7] ss:$8 sm:$0x3]
    %v81 = vlaneseq
    %v82 = vshrl.u32 %v81, 7
    %v83 = vsub.s32 0, %v82
    %v84 = vrot.slane %v79, %v83
    %v85 = vlaneseq
    %v86 = vshrl.u32 %v85, 7
    %v87 = vsub.s32 1, %v86
    %v88 = vrot.slane %v79, %v87
    %v92 = vunpack.c.l.b16 %v78
    %v93 = vunpack.c.h.b16 %v78
    %v94 = vpack.c.b16 %v92, %v92
    %v95 = vpack.c.b16 %v93, %v93
    %vm96 = vcmask 64512
    %v98 = vsel %vm96, %v77, 0
    %vm100 = vcmask 1043456
    %v102 = vsel %vm100, %v94, 0
    %v105 = vsel %vm100, %v95, 0
    %107 = vmatprep.subr.bf16.mxu0 0
    %108 = vmatpush1.bf16.msra.mxu0 0
    %109 = vmatprep.subr.bf16.mxu0 0
    %110 = vmatpush1.bf16.msra.mxu0 0
    %111 = vmatprep.subr.bf16.mxu0 0
    %112 = vmatpush1.bf16.msra.mxu0 0
    %113 = vmatprep.subr.bf16.mxu0 0
    %114 = vmatpush1.bf16.msra.mxu0 0
    %115 = vmatprep.subr.bf16.mxu0 0
    %116 = vmatpush1.bf16.msra.mxu0 0
    %117 = vmatprep.subr.bf16.mxu0 0
    %118 = vmatpush1.bf16.msra.mxu0 0
    %119 = vmatprep.subr.bf16.mxu0 0
    %120 = vmatpush1.bf16.msra.mxu0 0
    %121 = vmatprep.subr.bf16.mxu0 %v105
    %122 = vmatpush1.bf16.msra.mxu0 %v102
    %123 = vmatprep.subr.bf16.mxu0 0
    %124 = vmatpush2.bf16.msra.mxu0 0
    %125 = vmatprep.subr.bf16.mxu0 0
    %126 = vmatpush2.bf16.msra.mxu0 0
    %127 = vmatprep.subr.bf16.mxu0 0
    %128 = vmatpush2.bf16.msra.mxu0 0
    %129 = vmatprep.subr.bf16.mxu0 0
    %130 = vmatpush2.bf16.msra.mxu0 0
    %131 = vmatprep.subr.bf16.mxu0 0
    %132 = vmatpush2.bf16.msra.mxu0 0
    %133 = vmatprep.subr.bf16.mxu0 0
    %134 = vmatpush2.bf16.msra.mxu0 0
    %135 = vmatprep.subr.bf16.mxu0 0
    %136 = vmatpush2.bf16.msra.mxu0 0
    %137 = vmatprep.subr.bf16.mxu0 0
    %138 = vmatpush2.bf16.msra.mxu0 0
    %139 = vmatprep.mubr.bf16.mxu0 0
    %140 = vmatmul.mubr.bf16.gmra.mxu0 %v98
    %v141 = vpop.f32.mrf.mxu0
    %v142 = vadd.f32 %v84, %v141
    %v143 = vpop.f32.mrf.mxu0
    %v144 = vadd.f32 %v88, %v143
    %v145 = vpop.f32.mrf.mxu0
    %v146 = vpop.f32.mrf.mxu0
    %147 = vdwg.mxu0
    %v148 = vmax.f32 %v142, 0.0
    %v149 = vmax.f32 %v144, 0.0
    %v150 = vld [vmem:[#allocation2] sm:$0xff]
    %v151 = vld [vmem:[#allocation2 + $0x8] sm:$0xff]
    %v152 = vld [vmem:[#allocation2 + $0x10] sm:$0xff]
    %v153 = vld [vmem:[#allocation2 + $0x18] sm:$0xff]
    %v154 = vld [vmem:[#allocation2 + $0x20] sm:$0xff]
    %v155 = vld [vmem:[#allocation2 + $0x28] sm:$0xff]
    %v156 = vld [vmem:[#allocation2 + $0x30] sm:$0xff]
    %v157 = vld [vmem:[#allocation2 + $0x38] sm:$0xff]
    %v158 = vld [vmem:[#allocation2 + $0x40] sm:$0xff]
    %v159 = vld [vmem:[#allocation2 + $0x48] sm:$0xff]
    %v160 = vld [vmem:[#allocation2 + $0x50] sm:$0xff]
    %v161 = vld [vmem:[#allocation2 + $0x58] sm:$0xff]
    %v162 = vld [vmem:[#allocation2 + $0x60] sm:$0xff]
    %v163 = vld [vmem:[#allocation2 + $0x68] sm:$0xff]
    %v164 = vld [vmem:[#allocation2 + $0x70] sm:$0xff]
    %v165 = vld [vmem:[#allocation2 + $0x78] sm:$0xff]
    %v166 = vld [vmem:[#allocation2 + $0x80] sm:$0xff]
    %v167 = vld [vmem:[#allocation2 + $0x88] sm:$0xff]
    %v168 = vld [vmem:[#allocation2 + $0x90] sm:$0xff]
    %v169 = vld [vmem:[#allocation2 + $0x98] sm:$0xff]
    %v170 = vld [vmem:[#allocation2 + $0xa0] sm:$0xff]
    %v171 = vld [vmem:[#allocation2 + $0xa8] sm:$0xff]
    %v172 = vld [vmem:[#allocation2 + $0xb0] sm:$0xff]
    %v173 = vld [vmem:[#allocation2 + $0xb8] sm:$0xff]
    %v174 = vld [vmem:[#allocation2 + $0xc0] sm:$0xff]
    %v175 = vld [vmem:[#allocation2 + $0xc8] sm:$0xff]
    %v176 = vld [vmem:[#allocation2 + $0xd0] sm:$0xff]
    %v177 = vld [vmem:[#allocation2 + $0xd8] sm:$0xff]
    %v178 = vld [vmem:[#allocation2 + $0xe0] sm:$0xff]
    %v179 = vld [vmem:[#allocation2 + $0xe8] sm:$0xff]
    %v180 = vld [vmem:[#allocation2 + $0xf0] sm:$0xff]
    %v181 = vld [vmem:[#allocation2 + $0xf8] sm:$0xff]
    %v182 = vpack.c.bf16 %v148, %v148
    %v183 = vpack.c.bf16 %v149, %v149
    %s184 = scalar_lea.vmem [#allocation7], 1
    %v185 = vld [vmem:[%s184] ss:$8 sm:$0x3]
    %v187 = vlaneseq
    %v188 = vshrl.u32 %v187, 7
    %v189 = vsub.s32 0, %v188
    %v190 = vrot.slane %v185, %v189
    %v191 = vlaneseq
    %v192 = vshrl.u32 %v191, 7
    %v193 = vsub.s32 1, %v192
    %v194 = vrot.slane %v185, %v193
    %v229 = vunpack.c.l.b16 %v150
    %v230 = vunpack.c.h.b16 %v150
    %v231 = vunpack.c.l.b16 %v151
    %v232 = vunpack.c.h.b16 %v151
    %v233 = vunpack.c.l.b16 %v152
    %v234 = vunpack.c.h.b16 %v152
    %v235 = vunpack.c.l.b16 %v153
    %v236 = vunpack.c.h.b16 %v153
    %v237 = vunpack.c.l.b16 %v154
    %v238 = vunpack.c.h.b16 %v154
    %v239 = vunpack.c.l.b16 %v155
    %v240 = vunpack.c.h.b16 %v155
    %v241 = vunpack.c.l.b16 %v156
    %v242 = vunpack.c.h.b16 %v156
    %v243 = vunpack.c.l.b16 %v157
    %v244 = vunpack.c.h.b16 %v157
    %v245 = vunpack.c.l.b16 %v158
    %v246 = vunpack.c.h.b16 %v158
    %v247 = vunpack.c.l.b16 %v159
    %v248 = vunpack.c.h.b16 %v159
    %v249 = vunpack.c.l.b16 %v160
    %v250 = vunpack.c.h.b16 %v160
    %v251 = vunpack.c.l.b16 %v161
    %v252 = vunpack.c.h.b16 %v161
    %v253 = vunpack.c.l.b16 %v162
    %v254 = vunpack.c.h.b16 %v162
    %v255 = vunpack.c.l.b16 %v163
    %v256 = vunpack.c.h.b16 %v163
    %v257 = vunpack.c.l.b16 %v164
    %v258 = vunpack.c.h.b16 %v164
    %v259 = vunpack.c.l.b16 %v165
    %v260 = vunpack.c.h.b16 %v165
    %v261 = vunpack.c.l.b16 %v166
    %v262 = vunpack.c.h.b16 %v166
    %v263 = vunpack.c.l.b16 %v167
    %v264 = vunpack.c.h.b16 %v167
    %v265 = vunpack.c.l.b16 %v168
    %v266 = vunpack.c.h.b16 %v168
    %v267 = vunpack.c.l.b16 %v169
    %v268 = vunpack.c.h.b16 %v169
    %v269 = vunpack.c.l.b16 %v170
    %v270 = vunpack.c.h.b16 %v170
    %v271 = vunpack.c.l.b16 %v171
    %v272 = vunpack.c.h.b16 %v171
    %v273 = vunpack.c.l.b16 %v172
    %v274 = vunpack.c.h.b16 %v172
    %v275 = vunpack.c.l.b16 %v173
    %v276 = vunpack.c.h.b16 %v173
    %v277 = vunpack.c.l.b16 %v174
    %v278 = vunpack.c.h.b16 %v174
    %v279 = vunpack.c.l.b16 %v175
    %v280 = vunpack.c.h.b16 %v175
    %v281 = vunpack.c.l.b16 %v176
    %v282 = vunpack.c.h.b16 %v176
    %v283 = vunpack.c.l.b16 %v177
    %v284 = vunpack.c.h.b16 %v177
    %v285 = vunpack.c.l.b16 %v178
    %v286 = vunpack.c.h.b16 %v178
    %v287 = vunpack.c.l.b16 %v179
    %v288 = vunpack.c.h.b16 %v179
    %v289 = vunpack.c.l.b16 %v180
    %v290 = vunpack.c.h.b16 %v180
    %v291 = vunpack.c.l.b16 %v181
    %v292 = vunpack.c.h.b16 %v181
    %v293 = vpack.c.b16 %v231, %v229
    %v294 = vpack.c.b16 %v232, %v230
    %v295 = vpack.c.b16 %v235, %v233
    %v296 = vpack.c.b16 %v236, %v234
    %v297 = vpack.c.b16 %v239, %v237
    %v298 = vpack.c.b16 %v240, %v238
    %v299 = vpack.c.b16 %v243, %v241
    %v300 = vpack.c.b16 %v244, %v242
    %v301 = vpack.c.b16 %v247, %v245
    %v302 = vpack.c.b16 %v248, %v246
    %v303 = vpack.c.b16 %v251, %v249
    %v304 = vpack.c.b16 %v252, %v250
    %v305 = vpack.c.b16 %v255, %v253
    %v306 = vpack.c.b16 %v256, %v254
    %v307 = vpack.c.b16 %v259, %v257
    %v308 = vpack.c.b16 %v260, %v258
    %v309 = vpack.c.b16 %v263, %v261
    %v310 = vpack.c.b16 %v264, %v262
    %v311 = vpack.c.b16 %v267, %v265
    %v312 = vpack.c.b16 %v268, %v266
    %v313 = vpack.c.b16 %v271, %v269
    %v314 = vpack.c.b16 %v272, %v270
    %v315 = vpack.c.b16 %v275, %v273
    %v316 = vpack.c.b16 %v276, %v274
    %v317 = vpack.c.b16 %v279, %v277
    %v318 = vpack.c.b16 %v280, %v278
    %v319 = vpack.c.b16 %v283, %v281
    %v320 = vpack.c.b16 %v284, %v282
    %v321 = vpack.c.b16 %v287, %v285
    %v322 = vpack.c.b16 %v288, %v286
    %v323 = vpack.c.b16 %v291, %v289
    %v324 = vpack.c.b16 %v292, %v290
    %357 = vmatprep.subr.bf16.mxu0 %v308
    %358 = vmatpush1.bf16.msra.mxu0 %v307
    %359 = vmatprep.subr.bf16.mxu0 %v306
    %360 = vmatpush1.bf16.msra.mxu0 %v305
    %361 = vmatprep.subr.bf16.mxu0 %v304
    %362 = vmatpush1.bf16.msra.mxu0 %v303
    %363 = vmatprep.subr.bf16.mxu0 %v302
    %364 = vmatpush1.bf16.msra.mxu0 %v301
    %365 = vmatprep.subr.bf16.mxu0 %v300
    %366 = vmatpush1.bf16.msra.mxu0 %v299
    %367 = vmatprep.subr.bf16.mxu0 %v298
    %368 = vmatpush1.bf16.msra.mxu0 %v297
    %369 = vmatprep.subr.bf16.mxu0 %v296
    %370 = vmatpush1.bf16.msra.mxu0 %v295
    %371 = vmatprep.subr.bf16.mxu0 %v294
    %372 = vmatpush1.bf16.msra.mxu0 %v293
    %373 = vmatprep.subr.bf16.mxu0 %v324
    %374 = vmatpush2.bf16.msra.mxu0 %v323
    %375 = vmatprep.subr.bf16.mxu0 %v322
    %376 = vmatpush2.bf16.msra.mxu0 %v321
    %377 = vmatprep.subr.bf16.mxu0 %v320
    %378 = vmatpush2.bf16.msra.mxu0 %v319
    %379 = vmatprep.subr.bf16.mxu0 %v318
    %380 = vmatpush2.bf16.msra.mxu0 %v317
    %381 = vmatprep.subr.bf16.mxu0 %v316
    %382 = vmatpush2.bf16.msra.mxu0 %v315
    %383 = vmatprep.subr.bf16.mxu0 %v314
    %384 = vmatpush2.bf16.msra.mxu0 %v313
    %385 = vmatprep.subr.bf16.mxu0 %v312
    %386 = vmatpush2.bf16.msra.mxu0 %v311
    %387 = vmatprep.subr.bf16.mxu0 %v310
    %388 = vmatpush2.bf16.msra.mxu0 %v309
    %389 = vmatprep.mubr.bf16.mxu0 %v183
    %390 = vmatmul.mubr.bf16.gmra.mxu0 %v182
    %v391 = vpop.f32.mrf.mxu0
    %v392 = vadd.f32 %v190, %v391
    %v393 = vpop.f32.mrf.mxu0
    %v394 = vadd.f32 %v194, %v393
    %v395 = vpop.f32.mrf.mxu0
    %v396 = vpop.f32.mrf.mxu0
    %397 = vdwg.mxu0
    %v398 = vmax.f32 %v392, 0.0
    %v399 = vmax.f32 %v394, 0.0
    %v400 = vld [vmem:[#allocation4] sm:$0xff]
    %v401 = vld [vmem:[#allocation4 + $0x8] sm:$0xff]
    %v402 = vld [vmem:[#allocation4 + $0x10] sm:$0xff]
    %v403 = vld [vmem:[#allocation4 + $0x18] sm:$0xff]
    %v404 = vld [vmem:[#allocation4 + $0x20] sm:$0xff]
    %v405 = vld [vmem:[#allocation4 + $0x28] sm:$0xff]
    %v406 = vld [vmem:[#allocation4 + $0x30] sm:$0xff]
    %v407 = vld [vmem:[#allocation4 + $0x38] sm:$0xff]
    %v408 = vld [vmem:[#allocation4 + $0x40] sm:$0xff]
    %v409 = vld [vmem:[#allocation4 + $0x48] sm:$0xff]
    %v410 = vld [vmem:[#allocation4 + $0x50] sm:$0xff]
    %v411 = vld [vmem:[#allocation4 + $0x58] sm:$0xff]
    %v412 = vld [vmem:[#allocation4 + $0x60] sm:$0xff]
    %v413 = vld [vmem:[#allocation4 + $0x68] sm:$0xff]
    %v414 = vld [vmem:[#allocation4 + $0x70] sm:$0xff]
    %v415 = vld [vmem:[#allocation4 + $0x78] sm:$0xff]
    %v416 = vld [vmem:[#allocation4 + $0x80] sm:$0xff]
    %v417 = vld [vmem:[#allocation4 + $0x88] sm:$0xff]
    %v418 = vld [vmem:[#allocation4 + $0x90] sm:$0xff]
    %v419 = vld [vmem:[#allocation4 + $0x98] sm:$0xff]
    %v420 = vld [vmem:[#allocation4 + $0xa0] sm:$0xff]
    %v421 = vld [vmem:[#allocation4 + $0xa8] sm:$0xff]
    %v422 = vld [vmem:[#allocation4 + $0xb0] sm:$0xff]
    %v423 = vld [vmem:[#allocation4 + $0xb8] sm:$0xff]
    %v424 = vld [vmem:[#allocation4 + $0xc0] sm:$0xff]
    %v425 = vld [vmem:[#allocation4 + $0xc8] sm:$0xff]
    %v426 = vld [vmem:[#allocation4 + $0xd0] sm:$0xff]
    %v427 = vld [vmem:[#allocation4 + $0xd8] sm:$0xff]
    %v428 = vld [vmem:[#allocation4 + $0xe0] sm:$0xff]
    %v429 = vld [vmem:[#allocation4 + $0xe8] sm:$0xff]
    %v430 = vld [vmem:[#allocation4 + $0xf0] sm:$0xff]
    %v431 = vld [vmem:[#allocation4 + $0xf8] sm:$0xff]
    %v432 = vld [vmem:[#allocation4 + $0x100] sm:$0xff]
    %v433 = vld [vmem:[#allocation4 + $0x108] sm:$0xff]
    %v434 = vld [vmem:[#allocation4 + $0x110] sm:$0xff]
    %v435 = vld [vmem:[#allocation4 + $0x118] sm:$0xff]
    %v436 = vld [vmem:[#allocation4 + $0x120] sm:$0xff]
    %v437 = vld [vmem:[#allocation4 + $0x128] sm:$0xff]
    %v438 = vld [vmem:[#allocation4 + $0x130] sm:$0xff]
    %v439 = vld [vmem:[#allocation4 + $0x138] sm:$0xff]
    %v440 = vld [vmem:[#allocation4 + $0x140] sm:$0xff]
    %v441 = vld [vmem:[#allocation4 + $0x148] sm:$0xff]
    %v442 = vld [vmem:[#allocation4 + $0x150] sm:$0xff]
    %v443 = vld [vmem:[#allocation4 + $0x158] sm:$0xff]
    %v444 = vld [vmem:[#allocation4 + $0x160] sm:$0xff]
    %v445 = vld [vmem:[#allocation4 + $0x168] sm:$0xff]
    %v446 = vld [vmem:[#allocation4 + $0x170] sm:$0xff]
    %v447 = vld [vmem:[#allocation4 + $0x178] sm:$0xff]
    %v448 = vld [vmem:[#allocation4 + $0x180] sm:$0xff]
    %v449 = vld [vmem:[#allocation4 + $0x188] sm:$0xff]
    %v450 = vld [vmem:[#allocation4 + $0x190] sm:$0xff]
    %v451 = vld [vmem:[#allocation4 + $0x198] sm:$0xff]
    %v452 = vld [vmem:[#allocation4 + $0x1a0] sm:$0xff]
    %v453 = vld [vmem:[#allocation4 + $0x1a8] sm:$0xff]
    %v454 = vld [vmem:[#allocation4 + $0x1b0] sm:$0xff]
    %v455 = vld [vmem:[#allocation4 + $0x1b8] sm:$0xff]
    %v456 = vld [vmem:[#allocation4 + $0x1c0] sm:$0xff]
    %v457 = vld [vmem:[#allocation4 + $0x1c8] sm:$0xff]
    %v458 = vld [vmem:[#allocation4 + $0x1d0] sm:$0xff]
    %v459 = vld [vmem:[#allocation4 + $0x1d8] sm:$0xff]
    %v460 = vld [vmem:[#allocation4 + $0x1e0] sm:$0xff]
    %v461 = vld [vmem:[#allocation4 + $0x1e8] sm:$0xff]
    %v462 = vld [vmem:[#allocation4 + $0x1f0] sm:$0xff]
    %v463 = vld [vmem:[#allocation4 + $0x1f8] sm:$0xff]
    %v464 = vpack.c.bf16 %v398, %v398
    %v465 = vpack.c.bf16 %v399, %v399
    %s466 = scalar_lea.vmem [#allocation7], 2
    %v467 = vld [vmem:[%s466] ss:$8 sm:$0xf]
    %v469 = vlaneseq
    %v470 = vshrl.u32 %v469, 7
    %v471 = vsub.s32 0, %v470
    %v472 = vrot.slane %v467, %v471
    %v473 = vlaneseq
    %v474 = vshrl.u32 %v473, 7
    %v475 = vsub.s32 1, %v474
    %v476 = vrot.slane %v467, %v475
    %v477 = vlaneseq
    %v478 = vshrl.u32 %v477, 7
    %v479 = vsub.s32 2, %v478
    %v480 = vrot.slane %v467, %v479
    %v481 = vlaneseq
    %v482 = vshrl.u32 %v481, 7
    %v483 = vsub.s32 3, %v482
    %v484 = vrot.slane %v467, %v483
    %v553 = vunpack.c.l.b16 %v400
    %v554 = vunpack.c.h.b16 %v400
    %v555 = vunpack.c.l.b16 %v401
    %v556 = vunpack.c.h.b16 %v401
    %v557 = vunpack.c.l.b16 %v402
    %v558 = vunpack.c.h.b16 %v402
    %v559 = vunpack.c.l.b16 %v403
    %v560 = vunpack.c.h.b16 %v403
    %v561 = vunpack.c.l.b16 %v404
    %v562 = vunpack.c.h.b16 %v404
    %v563 = vunpack.c.l.b16 %v405
    %v564 = vunpack.c.h.b16 %v405
    %v565 = vunpack.c.l.b16 %v406
    %v566 = vunpack.c.h.b16 %v406
    %v567 = vunpack.c.l.b16 %v407
    %v568 = vunpack.c.h.b16 %v407
    %v569 = vunpack.c.l.b16 %v408
    %v570 = vunpack.c.h.b16 %v408
    %v571 = vunpack.c.l.b16 %v409
    %v572 = vunpack.c.h.b16 %v409
    %v573 = vunpack.c.l.b16 %v410
    %v574 = vunpack.c.h.b16 %v410
    %v575 = vunpack.c.l.b16 %v411
    %v576 = vunpack.c.h.b16 %v411
    %v577 = vunpack.c.l.b16 %v412
    %v578 = vunpack.c.h.b16 %v412
    %v579 = vunpack.c.l.b16 %v413
    %v580 = vunpack.c.h.b16 %v413
    %v581 = vunpack.c.l.b16 %v414
    %v582 = vunpack.c.h.b16 %v414
    %v583 = vunpack.c.l.b16 %v415
    %v584 = vunpack.c.h.b16 %v415
    %v585 = vunpack.c.l.b16 %v416
    %v586 = vunpack.c.h.b16 %v416
    %v587 = vunpack.c.l.b16 %v417
    %v588 = vunpack.c.h.b16 %v417
    %v589 = vunpack.c.l.b16 %v418
    %v590 = vunpack.c.h.b16 %v418
    %v591 = vunpack.c.l.b16 %v419
    %v592 = vunpack.c.h.b16 %v419
    %v593 = vunpack.c.l.b16 %v420
    %v594 = vunpack.c.h.b16 %v420
    %v595 = vunpack.c.l.b16 %v421
    %v596 = vunpack.c.h.b16 %v421
    %v597 = vunpack.c.l.b16 %v422
    %v598 = vunpack.c.h.b16 %v422
    %v599 = vunpack.c.l.b16 %v423
    %v600 = vunpack.c.h.b16 %v423
    %v601 = vunpack.c.l.b16 %v424
    %v602 = vunpack.c.h.b16 %v424
    %v603 = vunpack.c.l.b16 %v425
    %v604 = vunpack.c.h.b16 %v425
    %v605 = vunpack.c.l.b16 %v426
    %v606 = vunpack.c.h.b16 %v426
    %v607 = vunpack.c.l.b16 %v427
    %v608 = vunpack.c.h.b16 %v427
    %v609 = vunpack.c.l.b16 %v428
    %v610 = vunpack.c.h.b16 %v428
    %v611 = vunpack.c.l.b16 %v429
    %v612 = vunpack.c.h.b16 %v429
    %v613 = vunpack.c.l.b16 %v430
    %v614 = vunpack.c.h.b16 %v430
    %v615 = vunpack.c.l.b16 %v431
    %v616 = vunpack.c.h.b16 %v431
    %v617 = vunpack.c.l.b16 %v432
    %v618 = vunpack.c.h.b16 %v432
    %v619 = vunpack.c.l.b16 %v433
    %v620 = vunpack.c.h.b16 %v433
    %v621 = vunpack.c.l.b16 %v434
    %v622 = vunpack.c.h.b16 %v434
    %v623 = vunpack.c.l.b16 %v435
    %v624 = vunpack.c.h.b16 %v435
    %v625 = vunpack.c.l.b16 %v436
    %v626 = vunpack.c.h.b16 %v436
    %v627 = vunpack.c.l.b16 %v437
    %v628 = vunpack.c.h.b16 %v437
    %v629 = vunpack.c.l.b16 %v438
    %v630 = vunpack.c.h.b16 %v438
    %v631 = vunpack.c.l.b16 %v439
    %v632 = vunpack.c.h.b16 %v439
    %v633 = vunpack.c.l.b16 %v440
    %v634 = vunpack.c.h.b16 %v440
    %v635 = vunpack.c.l.b16 %v441
    %v636 = vunpack.c.h.b16 %v441
    %v637 = vunpack.c.l.b16 %v442
    %v638 = vunpack.c.h.b16 %v442
    %v639 = vunpack.c.l.b16 %v443
    %v640 = vunpack.c.h.b16 %v443
    %v641 = vunpack.c.l.b16 %v444
    %v642 = vunpack.c.h.b16 %v444
    %v643 = vunpack.c.l.b16 %v445
    %v644 = vunpack.c.h.b16 %v445
    %v645 = vunpack.c.l.b16 %v446
    %v646 = vunpack.c.h.b16 %v446
    %v647 = vunpack.c.l.b16 %v447
    %v648 = vunpack.c.h.b16 %v447
    %v649 = vunpack.c.l.b16 %v448
    %v650 = vunpack.c.h.b16 %v448
    %v651 = vunpack.c.l.b16 %v449
    %v652 = vunpack.c.h.b16 %v449
    %v653 = vunpack.c.l.b16 %v450
    %v654 = vunpack.c.h.b16 %v450
    %v655 = vunpack.c.l.b16 %v451
    %v656 = vunpack.c.h.b16 %v451
    %v657 = vunpack.c.l.b16 %v452
    %v658 = vunpack.c.h.b16 %v452
    %v659 = vunpack.c.l.b16 %v453
    %v660 = vunpack.c.h.b16 %v453
    %v661 = vunpack.c.l.b16 %v454
    %v662 = vunpack.c.h.b16 %v454
    %v663 = vunpack.c.l.b16 %v455
    %v664 = vunpack.c.h.b16 %v455
    %v665 = vunpack.c.l.b16 %v456
    %v666 = vunpack.c.h.b16 %v456
    %v667 = vunpack.c.l.b16 %v457
    %v668 = vunpack.c.h.b16 %v457
    %v669 = vunpack.c.l.b16 %v458
    %v670 = vunpack.c.h.b16 %v458
    %v671 = vunpack.c.l.b16 %v459
    %v672 = vunpack.c.h.b16 %v459
    %v673 = vunpack.c.l.b16 %v460
    %v674 = vunpack.c.h.b16 %v460
    %v675 = vunpack.c.l.b16 %v461
    %v676 = vunpack.c.h.b16 %v461
    %v677 = vunpack.c.l.b16 %v462
    %v678 = vunpack.c.h.b16 %v462
    %v679 = vunpack.c.l.b16 %v463
    %v680 = vunpack.c.h.b16 %v463
    %v681 = vpack.c.b16 %v557, %v553
    %v682 = vpack.c.b16 %v558, %v554
    %v683 = vpack.c.b16 %v559, %v555
    %v684 = vpack.c.b16 %v560, %v556
    %v685 = vpack.c.b16 %v565, %v561
    %v686 = vpack.c.b16 %v566, %v562
    %v687 = vpack.c.b16 %v567, %v563
    %v688 = vpack.c.b16 %v568, %v564
    %v689 = vpack.c.b16 %v573, %v569
    %v690 = vpack.c.b16 %v574, %v570
    %v691 = vpack.c.b16 %v575, %v571
    %v692 = vpack.c.b16 %v576, %v572
    %v693 = vpack.c.b16 %v581, %v577
    %v694 = vpack.c.b16 %v582, %v578
    %v695 = vpack.c.b16 %v583, %v579
    %v696 = vpack.c.b16 %v584, %v580
    %v697 = vpack.c.b16 %v589, %v585
    %v698 = vpack.c.b16 %v590, %v586
    %v699 = vpack.c.b16 %v591, %v587
    %v700 = vpack.c.b16 %v592, %v588
    %v701 = vpack.c.b16 %v597, %v593
    %v702 = vpack.c.b16 %v598, %v594
    %v703 = vpack.c.b16 %v599, %v595
    %v704 = vpack.c.b16 %v600, %v596
    %v705 = vpack.c.b16 %v605, %v601
    %v706 = vpack.c.b16 %v606, %v602
    %v707 = vpack.c.b16 %v607, %v603
    %v708 = vpack.c.b16 %v608, %v604
    %v709 = vpack.c.b16 %v613, %v609
    %v710 = vpack.c.b16 %v614, %v610
    %v711 = vpack.c.b16 %v615, %v611
    %v712 = vpack.c.b16 %v616, %v612
    %v713 = vpack.c.b16 %v621, %v617
    %v714 = vpack.c.b16 %v622, %v618
    %v715 = vpack.c.b16 %v623, %v619
    %v716 = vpack.c.b16 %v624, %v620
    %v717 = vpack.c.b16 %v629, %v625
    %v718 = vpack.c.b16 %v630, %v626
    %v719 = vpack.c.b16 %v631, %v627
    %v720 = vpack.c.b16 %v632, %v628
    %v721 = vpack.c.b16 %v637, %v633
    %v722 = vpack.c.b16 %v638, %v634
    %v723 = vpack.c.b16 %v639, %v635
    %v724 = vpack.c.b16 %v640, %v636
    %v725 = vpack.c.b16 %v645, %v641
    %v726 = vpack.c.b16 %v646, %v642
    %v727 = vpack.c.b16 %v647, %v643
    %v728 = vpack.c.b16 %v648, %v644
    %v729 = vpack.c.b16 %v653, %v649
    %v730 = vpack.c.b16 %v654, %v650
    %v731 = vpack.c.b16 %v655, %v651
    %v732 = vpack.c.b16 %v656, %v652
    %v733 = vpack.c.b16 %v661, %v657
    %v734 = vpack.c.b16 %v662, %v658
    %v735 = vpack.c.b16 %v663, %v659
    %v736 = vpack.c.b16 %v664, %v660
    %v737 = vpack.c.b16 %v669, %v665
    %v738 = vpack.c.b16 %v670, %v666
    %v739 = vpack.c.b16 %v671, %v667
    %v740 = vpack.c.b16 %v672, %v668
    %v741 = vpack.c.b16 %v677, %v673
    %v742 = vpack.c.b16 %v678, %v674
    %v743 = vpack.c.b16 %v679, %v675
    %v744 = vpack.c.b16 %v680, %v676
    %809 = vmatprep.subr.bf16.mxu0 %v710
    %810 = vmatpush1.bf16.msra.mxu0 %v709
    %811 = vmatprep.subr.bf16.mxu0 %v706
    %812 = vmatpush1.bf16.msra.mxu0 %v705
    %813 = vmatprep.subr.bf16.mxu0 %v702
    %814 = vmatpush1.bf16.msra.mxu0 %v701
    %815 = vmatprep.subr.bf16.mxu0 %v698
    %816 = vmatpush1.bf16.msra.mxu0 %v697
    %817 = vmatprep.subr.bf16.mxu0 %v694
    %818 = vmatpush1.bf16.msra.mxu0 %v693
    %819 = vmatprep.subr.bf16.mxu0 %v690
    %820 = vmatpush1.bf16.msra.mxu0 %v689
    %821 = vmatprep.subr.bf16.mxu0 %v686
    %822 = vmatpush1.bf16.msra.mxu0 %v685
    %823 = vmatprep.subr.bf16.mxu0 %v682
    %824 = vmatpush1.bf16.msra.mxu0 %v681
    %825 = vmatprep.subr.bf16.mxu0 %v742
    %826 = vmatpush2.bf16.msra.mxu0 %v741
    %827 = vmatprep.subr.bf16.mxu0 %v738
    %828 = vmatpush2.bf16.msra.mxu0 %v737
    %829 = vmatprep.subr.bf16.mxu0 %v734
    %830 = vmatpush2.bf16.msra.mxu0 %v733
    %831 = vmatprep.subr.bf16.mxu0 %v730
    %832 = vmatpush2.bf16.msra.mxu0 %v729
    %833 = vmatprep.subr.bf16.mxu0 %v726
    %834 = vmatpush2.bf16.msra.mxu0 %v725
    %835 = vmatprep.subr.bf16.mxu0 %v722
    %836 = vmatpush2.bf16.msra.mxu0 %v721
    %837 = vmatprep.subr.bf16.mxu0 %v718
    %838 = vmatpush2.bf16.msra.mxu0 %v717
    %839 = vmatprep.subr.bf16.mxu0 %v714
    %840 = vmatpush2.bf16.msra.mxu0 %v713
    %841 = vmatprep.mubr.bf16.mxu0 %v465
    %842 = vmatmul.mubr.bf16.gmra.mxu0 %v464
    %v843 = vpop.f32.mrf.mxu0
    %v844 = vadd.f32 %v472, %v843
    %v845 = vpop.f32.mrf.mxu0
    %v846 = vadd.f32 %v476, %v845
    %v847 = vpop.f32.mrf.mxu0
    %v848 = vpop.f32.mrf.mxu0
    %849 = vdwg.mxu0
    %850 = vmatprep.subr.bf16.mxu0 %v712
    %851 = vmatpush1.bf16.msra.mxu0 %v711
    %852 = vmatprep.subr.bf16.mxu0 %v708
    %853 = vmatpush1.bf16.msra.mxu0 %v707
    %854 = vmatprep.subr.bf16.mxu0 %v704
    %855 = vmatpush1.bf16.msra.mxu0 %v703
    %856 = vmatprep.subr.bf16.mxu0 %v700
    %857 = vmatpush1.bf16.msra.mxu0 %v699
    %858 = vmatprep.subr.bf16.mxu0 %v696
    %859 = vmatpush1.bf16.msra.mxu0 %v695
    %860 = vmatprep.subr.bf16.mxu0 %v692
    %861 = vmatpush1.bf16.msra.mxu0 %v691
    %862 = vmatprep.subr.bf16.mxu0 %v688
    %863 = vmatpush1.bf16.msra.mxu0 %v687
    %864 = vmatprep.subr.bf16.mxu0 %v684
    %865 = vmatpush1.bf16.msra.mxu0 %v683
    %866 = vmatprep.subr.bf16.mxu0 %v744
    %867 = vmatpush2.bf16.msra.mxu0 %v743
    %868 = vmatprep.subr.bf16.mxu0 %v740
    %869 = vmatpush2.bf16.msra.mxu0 %v739
    %870 = vmatprep.subr.bf16.mxu0 %v736
    %871 = vmatpush2.bf16.msra.mxu0 %v735
    %872 = vmatprep.subr.bf16.mxu0 %v732
    %873 = vmatpush2.bf16.msra.mxu0 %v731
    %874 = vmatprep.subr.bf16.mxu0 %v728
    %875 = vmatpush2.bf16.msra.mxu0 %v727
    %876 = vmatprep.subr.bf16.mxu0 %v724
    %877 = vmatpush2.bf16.msra.mxu0 %v723
    %878 = vmatprep.subr.bf16.mxu0 %v720
    %879 = vmatpush2.bf16.msra.mxu0 %v719
    %880 = vmatprep.subr.bf16.mxu0 %v716
    %881 = vmatpush2.bf16.msra.mxu0 %v715
    %882 = vmatprep.mubr.bf16.mxu0 %v465
    %883 = vmatmul.mubr.bf16.gmra.mxu0 %v464
    %v884 = vpop.f32.mrf.mxu0
    %v885 = vadd.f32 %v480, %v884
    %v886 = vpop.f32.mrf.mxu0
    %v887 = vadd.f32 %v484, %v886
    %v888 = vpop.f32.mrf.mxu0
    %v889 = vpop.f32.mrf.mxu0
    %890 = vdwg.mxu0
    %v891 = vmax.f32 %v844, 0.0
    %v892 = vmax.f32 %v846, 0.0
    %v893 = vmax.f32 %v885, 0.0
    %v894 = vmax.f32 %v887, 0.0
    %v895 = vpack.c.bf16 %v891, %v891
    %v896 = vpack.c.bf16 %v892, %v892
    %v897 = vpack.c.bf16 %v893, %v893
    %v898 = vpack.c.bf16 %v894, %v894
    %v901 = vrot.slane %v897, 4
    %v902 = vrot.slane %v898, 4
    %v905 = vsel %vm100, %v895, %v901
    %v909 = vsel %vm100, %v896, %v902
    %v911 = vld [vmem:[#allocation4 + $0x200] sm:$0xff]
    %v912 = vld [vmem:[#allocation4 + $0x208] sm:$0xff]
    %v913 = vld [vmem:[#allocation4 + $0x210] sm:$0xff]
    %v914 = vld [vmem:[#allocation4 + $0x218] sm:$0xff]
    %v915 = vld [vmem:[#allocation4 + $0x220] sm:$0xff]
    %v916 = vld [vmem:[#allocation4 + $0x228] sm:$0xff]
    %v917 = vld [vmem:[#allocation4 + $0x230] sm:$0xff]
    %v918 = vld [vmem:[#allocation4 + $0x238] sm:$0xff]
    %v919 = vld [vmem:[#allocation4 + $0x240] sm:$0xff]
    %v920 = vld [vmem:[#allocation4 + $0x248] sm:$0xff]
    %v921 = vld [vmem:[#allocation4 + $0x250] sm:$0xff]
    %v922 = vld [vmem:[#allocation4 + $0x258] sm:$0xff]
    %v923 = vld [vmem:[#allocation4 + $0x260] sm:$0xff]
    %v924 = vld [vmem:[#allocation4 + $0x268] sm:$0xff]
    %v925 = vld [vmem:[#allocation4 + $0x270] sm:$0xff]
    %v926 = vld [vmem:[#allocation4 + $0x278] sm:$0xff]
    %v927 = vld [vmem:[#allocation4 + $0x280] sm:$0xff]
    %v928 = vld [vmem:[#allocation4 + $0x288] sm:$0xff]
    %v929 = vld [vmem:[#allocation4 + $0x290] sm:$0xff]
    %v930 = vld [vmem:[#allocation4 + $0x298] sm:$0xff]
    %v931 = vld [vmem:[#allocation4 + $0x2a0] sm:$0xff]
    %v932 = vld [vmem:[#allocation4 + $0x2a8] sm:$0xff]
    %v933 = vld [vmem:[#allocation4 + $0x2b0] sm:$0xff]
    %v934 = vld [vmem:[#allocation4 + $0x2b8] sm:$0xff]
    %v935 = vld [vmem:[#allocation4 + $0x2c0] sm:$0xff]
    %v936 = vld [vmem:[#allocation4 + $0x2c8] sm:$0xff]
    %v937 = vld [vmem:[#allocation4 + $0x2d0] sm:$0xff]
    %v938 = vld [vmem:[#allocation4 + $0x2d8] sm:$0xff]
    %v939 = vld [vmem:[#allocation4 + $0x2e0] sm:$0xff]
    %v940 = vld [vmem:[#allocation4 + $0x2e8] sm:$0xff]
    %v941 = vld [vmem:[#allocation4 + $0x2f0] sm:$0xff]
    %v942 = vld [vmem:[#allocation4 + $0x2f8] sm:$0xff]
    %v943 = vld [vmem:[#allocation4 + $0x300] sm:$0xff]
    %v944 = vld [vmem:[#allocation4 + $0x308] sm:$0xff]
    %v945 = vld [vmem:[#allocation4 + $0x310] sm:$0xff]
    %v946 = vld [vmem:[#allocation4 + $0x318] sm:$0xff]
    %v947 = vld [vmem:[#allocation4 + $0x320] sm:$0xff]
    %v948 = vld [vmem:[#allocation4 + $0x328] sm:$0xff]
    %v949 = vld [vmem:[#allocation4 + $0x330] sm:$0xff]
    %v950 = vld [vmem:[#allocation4 + $0x338] sm:$0xff]
    %v951 = vld [vmem:[#allocation4 + $0x340] sm:$0xff]
    %v952 = vld [vmem:[#allocation4 + $0x348] sm:$0xff]
    %v953 = vld [vmem:[#allocation4 + $0x350] sm:$0xff]
    %v954 = vld [vmem:[#allocation4 + $0x358] sm:$0xff]
    %v955 = vld [vmem:[#allocation4 + $0x360] sm:$0xff]
    %v956 = vld [vmem:[#allocation4 + $0x368] sm:$0xff]
    %v957 = vld [vmem:[#allocation4 + $0x370] sm:$0xff]
    %v958 = vld [vmem:[#allocation4 + $0x378] sm:$0xff]
    %v959 = vld [vmem:[#allocation4 + $0x380] sm:$0xff]
    %v960 = vld [vmem:[#allocation4 + $0x388] sm:$0xff]
    %v961 = vld [vmem:[#allocation4 + $0x390] sm:$0xff]
    %v962 = vld [vmem:[#allocation4 + $0x398] sm:$0xff]
    %v963 = vld [vmem:[#allocation4 + $0x3a0] sm:$0xff]
    %v964 = vld [vmem:[#allocation4 + $0x3a8] sm:$0xff]
    %v965 = vld [vmem:[#allocation4 + $0x3b0] sm:$0xff]
    %v966 = vld [vmem:[#allocation4 + $0x3b8] sm:$0xff]
    %v967 = vld [vmem:[#allocation4 + $0x3c0] sm:$0xff]
    %v968 = vld [vmem:[#allocation4 + $0x3c8] sm:$0xff]
    %v969 = vld [vmem:[#allocation4 + $0x3d0] sm:$0xff]
    %v970 = vld [vmem:[#allocation4 + $0x3d8] sm:$0xff]
    %v971 = vld [vmem:[#allocation4 + $0x3e0] sm:$0xff]
    %v972 = vld [vmem:[#allocation4 + $0x3e8] sm:$0xff]
    %v973 = vld [vmem:[#allocation4 + $0x3f0] sm:$0xff]
    %v974 = vld [vmem:[#allocation4 + $0x3f8] sm:$0xff]
    %v1039 = vunpack.c.l.b16 %v911
    %v1040 = vunpack.c.h.b16 %v911
    %v1041 = vunpack.c.l.b16 %v912
    %v1042 = vunpack.c.h.b16 %v912
    %v1043 = vunpack.c.l.b16 %v913
    %v1044 = vunpack.c.h.b16 %v913
    %v1045 = vunpack.c.l.b16 %v914
    %v1046 = vunpack.c.h.b16 %v914
    %v1047 = vunpack.c.l.b16 %v915
    %v1048 = vunpack.c.h.b16 %v915
    %v1049 = vunpack.c.l.b16 %v916
    %v1050 = vunpack.c.h.b16 %v916
    %v1051 = vunpack.c.l.b16 %v917
    %v1052 = vunpack.c.h.b16 %v917
    %v1053 = vunpack.c.l.b16 %v918
    %v1054 = vunpack.c.h.b16 %v918
    %v1055 = vunpack.c.l.b16 %v919
    %v1056 = vunpack.c.h.b16 %v919
    %v1057 = vunpack.c.l.b16 %v920
    %v1058 = vunpack.c.h.b16 %v920
    %v1059 = vunpack.c.l.b16 %v921
    %v1060 = vunpack.c.h.b16 %v921
    %v1061 = vunpack.c.l.b16 %v922
    %v1062 = vunpack.c.h.b16 %v922
    %v1063 = vunpack.c.l.b16 %v923
    %v1064 = vunpack.c.h.b16 %v923
    %v1065 = vunpack.c.l.b16 %v924
    %v1066 = vunpack.c.h.b16 %v924
    %v1067 = vunpack.c.l.b16 %v925
    %v1068 = vunpack.c.h.b16 %v925
    %v1069 = vunpack.c.l.b16 %v926
    %v1070 = vunpack.c.h.b16 %v926
    %v1071 = vunpack.c.l.b16 %v927
    %v1072 = vunpack.c.h.b16 %v927
    %v1073 = vunpack.c.l.b16 %v928
    %v1074 = vunpack.c.h.b16 %v928
    %v1075 = vunpack.c.l.b16 %v929
    %v1076 = vunpack.c.h.b16 %v929
    %v1077 = vunpack.c.l.b16 %v930
    %v1078 = vunpack.c.h.b16 %v930
    %v1079 = vunpack.c.l.b16 %v931
    %v1080 = vunpack.c.h.b16 %v931
    %v1081 = vunpack.c.l.b16 %v932
    %v1082 = vunpack.c.h.b16 %v932
    %v1083 = vunpack.c.l.b16 %v933
    %v1084 = vunpack.c.h.b16 %v933
    %v1085 = vunpack.c.l.b16 %v934
    %v1086 = vunpack.c.h.b16 %v934
    %v1087 = vunpack.c.l.b16 %v935
    %v1088 = vunpack.c.h.b16 %v935
    %v1089 = vunpack.c.l.b16 %v936
    %v1090 = vunpack.c.h.b16 %v936
    %v1091 = vunpack.c.l.b16 %v937
    %v1092 = vunpack.c.h.b16 %v937
    %v1093 = vunpack.c.l.b16 %v938
    %v1094 = vunpack.c.h.b16 %v938
    %v1095 = vunpack.c.l.b16 %v939
    %v1096 = vunpack.c.h.b16 %v939
    %v1097 = vunpack.c.l.b16 %v940
    %v1098 = vunpack.c.h.b16 %v940
    %v1099 = vunpack.c.l.b16 %v941
    %v1100 = vunpack.c.h.b16 %v941
    %v1101 = vunpack.c.l.b16 %v942
    %v1102 = vunpack.c.h.b16 %v942
    %v1103 = vunpack.c.l.b16 %v943
    %v1104 = vunpack.c.h.b16 %v943
    %v1105 = vunpack.c.l.b16 %v944
    %v1106 = vunpack.c.h.b16 %v944
    %v1107 = vunpack.c.l.b16 %v945
    %v1108 = vunpack.c.h.b16 %v945
    %v1109 = vunpack.c.l.b16 %v946
    %v1110 = vunpack.c.h.b16 %v946
    %v1111 = vunpack.c.l.b16 %v947
    %v1112 = vunpack.c.h.b16 %v947
    %v1113 = vunpack.c.l.b16 %v948
    %v1114 = vunpack.c.h.b16 %v948
    %v1115 = vunpack.c.l.b16 %v949
    %v1116 = vunpack.c.h.b16 %v949
    %v1117 = vunpack.c.l.b16 %v950
    %v1118 = vunpack.c.h.b16 %v950
    %v1119 = vunpack.c.l.b16 %v951
    %v1120 = vunpack.c.h.b16 %v951
    %v1121 = vunpack.c.l.b16 %v952
    %v1122 = vunpack.c.h.b16 %v952
    %v1123 = vunpack.c.l.b16 %v953
    %v1124 = vunpack.c.h.b16 %v953
    %v1125 = vunpack.c.l.b16 %v954
    %v1126 = vunpack.c.h.b16 %v954
    %v1127 = vunpack.c.l.b16 %v955
    %v1128 = vunpack.c.h.b16 %v955
    %v1129 = vunpack.c.l.b16 %v956
    %v1130 = vunpack.c.h.b16 %v956
    %v1131 = vunpack.c.l.b16 %v957
    %v1132 = vunpack.c.h.b16 %v957
    %v1133 = vunpack.c.l.b16 %v958
    %v1134 = vunpack.c.h.b16 %v958
    %v1135 = vunpack.c.l.b16 %v959
    %v1136 = vunpack.c.h.b16 %v959
    %v1137 = vunpack.c.l.b16 %v960
    %v1138 = vunpack.c.h.b16 %v960
    %v1139 = vunpack.c.l.b16 %v961
    %v1140 = vunpack.c.h.b16 %v961
    %v1141 = vunpack.c.l.b16 %v962
    %v1142 = vunpack.c.h.b16 %v962
    %v1143 = vunpack.c.l.b16 %v963
    %v1144 = vunpack.c.h.b16 %v963
    %v1145 = vunpack.c.l.b16 %v964
    %v1146 = vunpack.c.h.b16 %v964
    %v1147 = vunpack.c.l.b16 %v965
    %v1148 = vunpack.c.h.b16 %v965
    %v1149 = vunpack.c.l.b16 %v966
    %v1150 = vunpack.c.h.b16 %v966
    %v1151 = vunpack.c.l.b16 %v967
    %v1152 = vunpack.c.h.b16 %v967
    %v1153 = vunpack.c.l.b16 %v968
    %v1154 = vunpack.c.h.b16 %v968
    %v1155 = vunpack.c.l.b16 %v969
    %v1156 = vunpack.c.h.b16 %v969
    %v1157 = vunpack.c.l.b16 %v970
    %v1158 = vunpack.c.h.b16 %v970
    %v1159 = vunpack.c.l.b16 %v971
    %v1160 = vunpack.c.h.b16 %v971
    %v1161 = vunpack.c.l.b16 %v972
    %v1162 = vunpack.c.h.b16 %v972
    %v1163 = vunpack.c.l.b16 %v973
    %v1164 = vunpack.c.h.b16 %v973
    %v1165 = vunpack.c.l.b16 %v974
    %v1166 = vunpack.c.h.b16 %v974
    %v1167 = vpack.c.b16 %v1043, %v1039
    %v1168 = vpack.c.b16 %v1044, %v1040
    %v1169 = vpack.c.b16 %v1045, %v1041
    %v1170 = vpack.c.b16 %v1046, %v1042
    %v1171 = vpack.c.b16 %v1051, %v1047
    %v1172 = vpack.c.b16 %v1052, %v1048
    %v1173 = vpack.c.b16 %v1053, %v1049
    %v1174 = vpack.c.b16 %v1054, %v1050
    %v1175 = vpack.c.b16 %v1059, %v1055
    %v1176 = vpack.c.b16 %v1060, %v1056
    %v1177 = vpack.c.b16 %v1061, %v1057
    %v1178 = vpack.c.b16 %v1062, %v1058
    %v1179 = vpack.c.b16 %v1067, %v1063
    %v1180 = vpack.c.b16 %v1068, %v1064
    %v1181 = vpack.c.b16 %v1069, %v1065
    %v1182 = vpack.c.b16 %v1070, %v1066
    %v1183 = vpack.c.b16 %v1075, %v1071
    %v1184 = vpack.c.b16 %v1076, %v1072
    %v1185 = vpack.c.b16 %v1077, %v1073
    %v1186 = vpack.c.b16 %v1078, %v1074
    %v1187 = vpack.c.b16 %v1083, %v1079
    %v1188 = vpack.c.b16 %v1084, %v1080
    %v1189 = vpack.c.b16 %v1085, %v1081
    %v1190 = vpack.c.b16 %v1086, %v1082
    %v1191 = vpack.c.b16 %v1091, %v1087
    %v1192 = vpack.c.b16 %v1092, %v1088
    %v1193 = vpack.c.b16 %v1093, %v1089
    %v1194 = vpack.c.b16 %v1094, %v1090
    %v1195 = vpack.c.b16 %v1099, %v1095
    %v1196 = vpack.c.b16 %v1100, %v1096
    %v1197 = vpack.c.b16 %v1101, %v1097
    %v1198 = vpack.c.b16 %v1102, %v1098
    %v1199 = vpack.c.b16 %v1107, %v1103
    %v1200 = vpack.c.b16 %v1108, %v1104
    %v1201 = vpack.c.b16 %v1109, %v1105
    %v1202 = vpack.c.b16 %v1110, %v1106
    %v1203 = vpack.c.b16 %v1115, %v1111
    %v1204 = vpack.c.b16 %v1116, %v1112
    %v1205 = vpack.c.b16 %v1117, %v1113
    %v1206 = vpack.c.b16 %v1118, %v1114
    %v1207 = vpack.c.b16 %v1123, %v1119
    %v1208 = vpack.c.b16 %v1124, %v1120
    %v1209 = vpack.c.b16 %v1125, %v1121
    %v1210 = vpack.c.b16 %v1126, %v1122
    %v1211 = vpack.c.b16 %v1131, %v1127
    %v1212 = vpack.c.b16 %v1132, %v1128
    %v1213 = vpack.c.b16 %v1133, %v1129
    %v1214 = vpack.c.b16 %v1134, %v1130
    %v1215 = vpack.c.b16 %v1139, %v1135
    %v1216 = vpack.c.b16 %v1140, %v1136
    %v1217 = vpack.c.b16 %v1141, %v1137
    %v1218 = vpack.c.b16 %v1142, %v1138
    %v1219 = vpack.c.b16 %v1147, %v1143
    %v1220 = vpack.c.b16 %v1148, %v1144
    %v1221 = vpack.c.b16 %v1149, %v1145
    %v1222 = vpack.c.b16 %v1150, %v1146
    %v1223 = vpack.c.b16 %v1155, %v1151
    %v1224 = vpack.c.b16 %v1156, %v1152
    %v1225 = vpack.c.b16 %v1157, %v1153
    %v1226 = vpack.c.b16 %v1158, %v1154
    %v1227 = vpack.c.b16 %v1163, %v1159
    %v1228 = vpack.c.b16 %v1164, %v1160
    %v1229 = vpack.c.b16 %v1165, %v1161
    %v1230 = vpack.c.b16 %v1166, %v1162
    %1295 = vmatprep.subr.bf16.mxu0 %v1196
    %1296 = vmatpush1.bf16.msra.mxu0 %v1195
    %1297 = vmatprep.subr.bf16.mxu0 %v1192
    %1298 = vmatpush1.bf16.msra.mxu0 %v1191
    %1299 = vmatprep.subr.bf16.mxu0 %v1188
    %1300 = vmatpush1.bf16.msra.mxu0 %v1187
    %1301 = vmatprep.subr.bf16.mxu0 %v1184
    %1302 = vmatpush1.bf16.msra.mxu0 %v1183
    %1303 = vmatprep.subr.bf16.mxu0 %v1180
    %1304 = vmatpush1.bf16.msra.mxu0 %v1179
    %1305 = vmatprep.subr.bf16.mxu0 %v1176
    %1306 = vmatpush1.bf16.msra.mxu0 %v1175
    %1307 = vmatprep.subr.bf16.mxu0 %v1172
    %1308 = vmatpush1.bf16.msra.mxu0 %v1171
    %1309 = vmatprep.subr.bf16.mxu0 %v1168
    %1310 = vmatpush1.bf16.msra.mxu0 %v1167
    %1311 = vmatprep.subr.bf16.mxu0 %v1228
    %1312 = vmatpush2.bf16.msra.mxu0 %v1227
    %1313 = vmatprep.subr.bf16.mxu0 %v1224
    %1314 = vmatpush2.bf16.msra.mxu0 %v1223
    %1315 = vmatprep.subr.bf16.mxu0 %v1220
    %1316 = vmatpush2.bf16.msra.mxu0 %v1219
    %1317 = vmatprep.subr.bf16.mxu0 %v1216
    %1318 = vmatpush2.bf16.msra.mxu0 %v1215
    %1319 = vmatprep.subr.bf16.mxu0 %v1212
    %1320 = vmatpush2.bf16.msra.mxu0 %v1211
    %1321 = vmatprep.subr.bf16.mxu0 %v1208
    %1322 = vmatpush2.bf16.msra.mxu0 %v1207
    %1323 = vmatprep.subr.bf16.mxu0 %v1204
    %1324 = vmatpush2.bf16.msra.mxu0 %v1203
    %1325 = vmatprep.subr.bf16.mxu0 %v1200
    %1326 = vmatpush2.bf16.msra.mxu0 %v1199
    %1327 = vmatprep.mubr.bf16.mxu0 %v909
    %1328 = vmatmul.mubr.bf16.gmra.mxu0 %v905
    %v1329 = vpop.f32.mrf.mxu0
    %v1330 = vadd.f32 0.0, %v1329
    %v1331 = vpop.f32.mrf.mxu0
    %v1332 = vpop.f32.mrf.mxu0
    %v1333 = vadd.f32 0.0, %v1332
    %v1334 = vpop.f32.mrf.mxu0
    %v1335 = vadd.f32 0.0, %v1334
    %1336 = vdwg.mxu0
    %1337 = vmatprep.subr.bf16.mxu0 %v1198
    %1338 = vmatpush1.bf16.msra.mxu0 %v1197
    %1339 = vmatprep.subr.bf16.mxu0 %v1194
    %1340 = vmatpush1.bf16.msra.mxu0 %v1193
    %1341 = vmatprep.subr.bf16.mxu0 %v1190
    %1342 = vmatpush1.bf16.msra.mxu0 %v1189
    %1343 = vmatprep.subr.bf16.mxu0 %v1186
    %1344 = vmatpush1.bf16.msra.mxu0 %v1185
    %1345 = vmatprep.subr.bf16.mxu0 %v1182
    %1346 = vmatpush1.bf16.msra.mxu0 %v1181
    %1347 = vmatprep.subr.bf16.mxu0 %v1178
    %1348 = vmatpush1.bf16.msra.mxu0 %v1177
    %1349 = vmatprep.subr.bf16.mxu0 %v1174
    %1350 = vmatpush1.bf16.msra.mxu0 %v1173
    %1351 = vmatprep.subr.bf16.mxu0 %v1170
    %1352 = vmatpush1.bf16.msra.mxu0 %v1169
    %1353 = vmatprep.subr.bf16.mxu0 %v1230
    %1354 = vmatpush2.bf16.msra.mxu0 %v1229
    %1355 = vmatprep.subr.bf16.mxu0 %v1226
    %1356 = vmatpush2.bf16.msra.mxu0 %v1225
    %1357 = vmatprep.subr.bf16.mxu0 %v1222
    %1358 = vmatpush2.bf16.msra.mxu0 %v1221
    %1359 = vmatprep.subr.bf16.mxu0 %v1218
    %1360 = vmatpush2.bf16.msra.mxu0 %v1217
    %1361 = vmatprep.subr.bf16.mxu0 %v1214
    %1362 = vmatpush2.bf16.msra.mxu0 %v1213
    %1363 = vmatprep.subr.bf16.mxu0 %v1210
    %1364 = vmatpush2.bf16.msra.mxu0 %v1209
    %1365 = vmatprep.subr.bf16.mxu0 %v1206
    %1366 = vmatpush2.bf16.msra.mxu0 %v1205
    %1367 = vmatprep.subr.bf16.mxu0 %v1202
    %1368 = vmatpush2.bf16.msra.mxu0 %v1201
    %1369 = vmatprep.mubr.bf16.mxu0 %v909
    %1370 = vmatmul.mubr.bf16.gmra.mxu0 %v905
    %v1371 = vpop.f32.mrf.mxu0
    %v1372 = vadd.f32 0.0, %v1371
    %v1373 = vpop.f32.mrf.mxu0
    %v1374 = vadd.f32 0.0, %v1373
    %v1375 = vpop.f32.mrf.mxu0
    %v1376 = vadd.f32 0.0, %v1375
    %v1377 = vpop.f32.mrf.mxu0
    %v1378 = vadd.f32 0.0, %v1377
    %1379 = vdwg.mxu0
    %s1380 = scalar_lea.vmem [#allocation7], 3
    %v1381 = vld [vmem:[%s1380] ss:$8 sm:$0xf]
    %v1383 = vlaneseq
    %v1384 = vshrl.u32 %v1383, 7
    %v1385 = vsub.s32 0, %v1384
    %v1386 = vrot.slane %v1381, %v1385
    %v1387 = vlaneseq
    %v1388 = vshrl.u32 %v1387, 7
    %v1389 = vsub.s32 1, %v1388
    %v1390 = vrot.slane %v1381, %v1389
    %v1391 = vlaneseq
    %v1392 = vshrl.u32 %v1391, 7
    %v1393 = vsub.s32 2, %v1392
    %v1394 = vrot.slane %v1381, %v1393
    %v1395 = vlaneseq
    %v1396 = vshrl.u32 %v1395, 7
    %v1397 = vsub.s32 3, %v1396
    %v1398 = vrot.slane %v1381, %v1397
    %v1403 = vadd.f32 %v1330, %v1386
    %v1404 = vadd.f32 %v1372, %v1394
    %v1405 = vadd.f32 %v1374, %v1398
    %v1406 = vxor.u32 %v1403, 2147483648
    %v1407 = vmul.f32 %v1406, 1.442695
    %v1408 = vpow.pop %v1407
    %v1409 = vadd.f32 %v1408, 1.0
    %v1410 = vrcp.pop %v1409
    %v1411 = vmul.f32 1.0, %v1410
    %v1412 = vtanh.pop %v1404
    %v1413 = vmul.f32 %v1411, %v1412
    %v1414 = vxor.u32 %v1405, 2147483648
    %v1415 = vmul.f32 %v1414, 1.442695
    %v1416 = vpow.pop %v1415
    %v1417 = vadd.f32 %v1416, 1.0
    %v1418 = vrcp.pop %v1417
    %v1419 = vmul.f32 1.0, %v1418
    %v1420 = vtanh.pop %v1413
    %v1421 = vmul.f32 %v1419, %v1420
    %v1422 = vld [vmem:[#allocation4 + $0x400] sm:$0xff]
    %v1423 = vld [vmem:[#allocation4 + $0x408] sm:$0xff]
    %v1424 = vld [vmem:[#allocation4 + $0x410] sm:$0xff]
    %v1425 = vld [vmem:[#allocation4 + $0x418] sm:$0xff]
    %v1426 = vld [vmem:[#allocation4 + $0x420] sm:$0xff]
    %v1427 = vld [vmem:[#allocation4 + $0x428] sm:$0xff]
    %v1428 = vld [vmem:[#allocation4 + $0x430] sm:$0xff]
    %v1429 = vld [vmem:[#allocation4 + $0x438] sm:$0xff]
    %v1430 = vld [vmem:[#allocation4 + $0x440] sm:$0xff]
    %v1431 = vld [vmem:[#allocation4 + $0x448] sm:$0xff]
    %v1432 = vld [vmem:[#allocation4 + $0x450] sm:$0xff]
    %v1433 = vld [vmem:[#allocation4 + $0x458] sm:$0xff]
    %v1434 = vld [vmem:[#allocation4 + $0x460] sm:$0xff]
    %v1435 = vld [vmem:[#allocation4 + $0x468] sm:$0xff]
    %v1436 = vld [vmem:[#allocation4 + $0x470] sm:$0xff]
    %v1437 = vld [vmem:[#allocation4 + $0x478] sm:$0xff]
    %v1438 = vld [vmem:[#allocation4 + $0x480] sm:$0xff]
    %v1439 = vld [vmem:[#allocation4 + $0x488] sm:$0xff]
    %v1440 = vld [vmem:[#allocation4 + $0x490] sm:$0xff]
    %v1441 = vld [vmem:[#allocation4 + $0x498] sm:$0xff]
    %v1442 = vld [vmem:[#allocation4 + $0x4a0] sm:$0xff]
    %v1443 = vld [vmem:[#allocation4 + $0x4a8] sm:$0xff]
    %v1444 = vld [vmem:[#allocation4 + $0x4b0] sm:$0xff]
    %v1445 = vld [vmem:[#allocation4 + $0x4b8] sm:$0xff]
    %v1446 = vld [vmem:[#allocation4 + $0x4c0] sm:$0xff]
    %v1447 = vld [vmem:[#allocation4 + $0x4c8] sm:$0xff]
    %v1448 = vld [vmem:[#allocation4 + $0x4d0] sm:$0xff]
    %v1449 = vld [vmem:[#allocation4 + $0x4d8] sm:$0xff]
    %v1450 = vld [vmem:[#allocation4 + $0x4e0] sm:$0xff]
    %v1451 = vld [vmem:[#allocation4 + $0x4e8] sm:$0xff]
    %v1452 = vld [vmem:[#allocation4 + $0x4f0] sm:$0xff]
    %v1453 = vld [vmem:[#allocation4 + $0x4f8] sm:$0xff]
    %v1454 = vpack.c.bf16 %v1421, %v1421
    %v1487 = vunpack.c.l.b16 %v1422
    %v1488 = vunpack.c.h.b16 %v1422
    %v1489 = vunpack.c.l.b16 %v1423
    %v1490 = vunpack.c.h.b16 %v1423
    %v1491 = vunpack.c.l.b16 %v1424
    %v1492 = vunpack.c.h.b16 %v1424
    %v1493 = vunpack.c.l.b16 %v1425
    %v1494 = vunpack.c.h.b16 %v1425
    %v1495 = vunpack.c.l.b16 %v1426
    %v1496 = vunpack.c.h.b16 %v1426
    %v1497 = vunpack.c.l.b16 %v1427
    %v1498 = vunpack.c.h.b16 %v1427
    %v1499 = vunpack.c.l.b16 %v1428
    %v1500 = vunpack.c.h.b16 %v1428
    %v1501 = vunpack.c.l.b16 %v1429
    %v1502 = vunpack.c.h.b16 %v1429
    %v1503 = vunpack.c.l.b16 %v1430
    %v1504 = vunpack.c.h.b16 %v1430
    %v1505 = vunpack.c.l.b16 %v1431
    %v1506 = vunpack.c.h.b16 %v1431
    %v1507 = vunpack.c.l.b16 %v1432
    %v1508 = vunpack.c.h.b16 %v1432
    %v1509 = vunpack.c.l.b16 %v1433
    %v1510 = vunpack.c.h.b16 %v1433
    %v1511 = vunpack.c.l.b16 %v1434
    %v1512 = vunpack.c.h.b16 %v1434
    %v1513 = vunpack.c.l.b16 %v1435
    %v1514 = vunpack.c.h.b16 %v1435
    %v1515 = vunpack.c.l.b16 %v1436
    %v1516 = vunpack.c.h.b16 %v1436
    %v1517 = vunpack.c.l.b16 %v1437
    %v1518 = vunpack.c.h.b16 %v1437
    %v1519 = vunpack.c.l.b16 %v1438
    %v1520 = vunpack.c.h.b16 %v1438
    %v1521 = vunpack.c.l.b16 %v1439
    %v1522 = vunpack.c.h.b16 %v1439
    %v1523 = vunpack.c.l.b16 %v1440
    %v1524 = vunpack.c.h.b16 %v1440
    %v1525 = vunpack.c.l.b16 %v1441
    %v1526 = vunpack.c.h.b16 %v1441
    %v1527 = vunpack.c.l.b16 %v1442
    %v1528 = vunpack.c.h.b16 %v1442
    %v1529 = vunpack.c.l.b16 %v1443
    %v1530 = vunpack.c.h.b16 %v1443
    %v1531 = vunpack.c.l.b16 %v1444
    %v1532 = vunpack.c.h.b16 %v1444
    %v1533 = vunpack.c.l.b16 %v1445
    %v1534 = vunpack.c.h.b16 %v1445
    %v1535 = vunpack.c.l.b16 %v1446
    %v1536 = vunpack.c.h.b16 %v1446
    %v1537 = vunpack.c.l.b16 %v1447
    %v1538 = vunpack.c.h.b16 %v1447
    %v1539 = vunpack.c.l.b16 %v1448
    %v1540 = vunpack.c.h.b16 %v1448
    %v1541 = vunpack.c.l.b16 %v1449
    %v1542 = vunpack.c.h.b16 %v1449
    %v1543 = vunpack.c.l.b16 %v1450
    %v1544 = vunpack.c.h.b16 %v1450
    %v1545 = vunpack.c.l.b16 %v1451
    %v1546 = vunpack.c.h.b16 %v1451
    %v1547 = vunpack.c.l.b16 %v1452
    %v1548 = vunpack.c.h.b16 %v1452
    %v1549 = vunpack.c.l.b16 %v1453
    %v1550 = vunpack.c.h.b16 %v1453
    %v1551 = vpack.c.b16 %v1491, %v1487
    %v1552 = vpack.c.b16 %v1492, %v1488
    %v1553 = vpack.c.b16 %v1493, %v1489
    %v1554 = vpack.c.b16 %v1494, %v1490
    %v1555 = vpack.c.b16 %v1499, %v1495
    %v1556 = vpack.c.b16 %v1500, %v1496
    %v1557 = vpack.c.b16 %v1501, %v1497
    %v1558 = vpack.c.b16 %v1502, %v1498
    %v1559 = vpack.c.b16 %v1507, %v1503
    %v1560 = vpack.c.b16 %v1508, %v1504
    %v1561 = vpack.c.b16 %v1509, %v1505
    %v1562 = vpack.c.b16 %v1510, %v1506
    %v1563 = vpack.c.b16 %v1515, %v1511
    %v1564 = vpack.c.b16 %v1516, %v1512
    %v1565 = vpack.c.b16 %v1517, %v1513
    %v1566 = vpack.c.b16 %v1518, %v1514
    %v1567 = vpack.c.b16 %v1523, %v1519
    %v1568 = vpack.c.b16 %v1524, %v1520
    %v1569 = vpack.c.b16 %v1525, %v1521
    %v1570 = vpack.c.b16 %v1526, %v1522
    %v1571 = vpack.c.b16 %v1531, %v1527
    %v1572 = vpack.c.b16 %v1532, %v1528
    %v1573 = vpack.c.b16 %v1533, %v1529
    %v1574 = vpack.c.b16 %v1534, %v1530
    %v1575 = vpack.c.b16 %v1539, %v1535
    %v1576 = vpack.c.b16 %v1540, %v1536
    %v1577 = vpack.c.b16 %v1541, %v1537
    %v1578 = vpack.c.b16 %v1542, %v1538
    %v1579 = vpack.c.b16 %v1547, %v1543
    %v1580 = vpack.c.b16 %v1548, %v1544
    %v1581 = vpack.c.b16 %v1549, %v1545
    %v1582 = vpack.c.b16 %v1550, %v1546
    %1615 = vmatprep.subr.bf16.mxu0 %v1580
    %1616 = vmatpush1.bf16.msra.mxu0 %v1579
    %1617 = vmatprep.subr.bf16.mxu0 %v1576
    %1618 = vmatpush1.bf16.msra.mxu0 %v1575
    %1619 = vmatprep.subr.bf16.mxu0 %v1572
    %1620 = vmatpush1.bf16.msra.mxu0 %v1571
    %1621 = vmatprep.subr.bf16.mxu0 %v1568
    %1622 = vmatpush1.bf16.msra.mxu0 %v1567
    %1623 = vmatprep.subr.bf16.mxu0 %v1564
    %1624 = vmatpush1.bf16.msra.mxu0 %v1563
    %1625 = vmatprep.subr.bf16.mxu0 %v1560
    %1626 = vmatpush1.bf16.msra.mxu0 %v1559
    %1627 = vmatprep.subr.bf16.mxu0 %v1556
    %1628 = vmatpush1.bf16.msra.mxu0 %v1555
    %1629 = vmatprep.subr.bf16.mxu0 %v1552
    %1630 = vmatpush1.bf16.msra.mxu0 %v1551
    %1631 = vmatprep.subr.bf16.mxu0 0
    %1632 = vmatpush2.bf16.msra.mxu0 0
    %1633 = vmatprep.subr.bf16.mxu0 0
    %1634 = vmatpush2.bf16.msra.mxu0 0
    %1635 = vmatprep.subr.bf16.mxu0 0
    %1636 = vmatpush2.bf16.msra.mxu0 0
    %1637 = vmatprep.subr.bf16.mxu0 0
    %1638 = vmatpush2.bf16.msra.mxu0 0
    %1639 = vmatprep.subr.bf16.mxu0 0
    %1640 = vmatpush2.bf16.msra.mxu0 0
    %1641 = vmatprep.subr.bf16.mxu0 0
    %1642 = vmatpush2.bf16.msra.mxu0 0
    %1643 = vmatprep.subr.bf16.mxu0 0
    %1644 = vmatpush2.bf16.msra.mxu0 0
    %1645 = vmatprep.subr.bf16.mxu0 0
    %1646 = vmatpush2.bf16.msra.mxu0 0
    %1647 = vmatprep.mubr.bf16.mxu0 0
    %1648 = vmatmul.mubr.bf16.gmra.mxu0 %v1454
    %v1649 = vpop.f32.mrf.mxu0
    %v1650 = vadd.f32 0.0, %v1649
    %v1651 = vpop.f32.mrf.mxu0
    %v1652 = vadd.f32 0.0, %v1651
    %v1653 = vpop.f32.mrf.mxu0
    %v1654 = vpop.f32.mrf.mxu0
    %1655 = vdwg.mxu0
    %1656 = vmatprep.subr.bf16.mxu0 %v1582
    %1657 = vmatpush1.bf16.msra.mxu0 %v1581
    %1658 = vmatprep.subr.bf16.mxu0 %v1578
    %1659 = vmatpush1.bf16.msra.mxu0 %v1577
    %1660 = vmatprep.subr.bf16.mxu0 %v1574
    %1661 = vmatpush1.bf16.msra.mxu0 %v1573
    %1662 = vmatprep.subr.bf16.mxu0 %v1570
    %1663 = vmatpush1.bf16.msra.mxu0 %v1569
    %1664 = vmatprep.subr.bf16.mxu0 %v1566
    %1665 = vmatpush1.bf16.msra.mxu0 %v1565
    %1666 = vmatprep.subr.bf16.mxu0 %v1562
    %1667 = vmatpush1.bf16.msra.mxu0 %v1561
    %1668 = vmatprep.subr.bf16.mxu0 %v1558
    %1669 = vmatpush1.bf16.msra.mxu0 %v1557
    %1670 = vmatprep.subr.bf16.mxu0 %v1554
    %1671 = vmatpush1.bf16.msra.mxu0 %v1553
    %1672 = vmatprep.subr.bf16.mxu0 0
    %1673 = vmatpush2.bf16.msra.mxu0 0
    %1674 = vmatprep.subr.bf16.mxu0 0
    %1675 = vmatpush2.bf16.msra.mxu0 0
    %1676 = vmatprep.subr.bf16.mxu0 0
    %1677 = vmatpush2.bf16.msra.mxu0 0
    %1678 = vmatprep.subr.bf16.mxu0 0
    %1679 = vmatpush2.bf16.msra.mxu0 0
    %1680 = vmatprep.subr.bf16.mxu0 0
    %1681 = vmatpush2.bf16.msra.mxu0 0
    %1682 = vmatprep.subr.bf16.mxu0 0
    %1683 = vmatpush2.bf16.msra.mxu0 0
    %1684 = vmatprep.subr.bf16.mxu0 0
    %1685 = vmatpush2.bf16.msra.mxu0 0
    %1686 = vmatprep.subr.bf16.mxu0 0
    %1687 = vmatpush2.bf16.msra.mxu0 0
    %1688 = vmatprep.mubr.bf16.mxu0 0
    %1689 = vmatmul.mubr.bf16.gmra.mxu0 %v1454
    %v1690 = vpop.f32.mrf.mxu0
    %v1691 = vadd.f32 0.0, %v1690
    %v1692 = vpop.f32.mrf.mxu0
    %v1693 = vadd.f32 0.0, %v1692
    %v1694 = vpop.f32.mrf.mxu0
    %v1695 = vpop.f32.mrf.mxu0
    %1696 = vdwg.mxu0
    %v1697 = vadd.f32 %v1333, %v1650
    %v1698 = vadd.f32 %v1335, %v1652
    %v1699 = vadd.f32 %v1376, %v1691
    %v1700 = vadd.f32 %v1378, %v1693
    %v1701 = vadd.f32 %v1697, %v1386
    %v1702 = vadd.f32 %v1698, %v1390
    %v1703 = vadd.f32 %v1699, %v1394
    %v1704 = vadd.f32 %v1700, %v1398
    %v1705 = vxor.u32 %v1702, 2147483648
    %v1706 = vmul.f32 %v1705, 1.442695
    %v1707 = vpow.pop %v1706
    %v1708 = vadd.f32 %v1707, 1.0
    %v1709 = vrcp.pop %v1708
    %v1710 = vmul.f32 1.0, %v1709
    %v1711 = vmul.f32 %v1710, %v1413
    %v1712 = vxor.u32 %v1701, 2147483648
    %v1713 = vmul.f32 %v1712, 1.442695
    %v1714 = vpow.pop %v1713
    %v1715 = vadd.f32 %v1714, 1.0
    %v1716 = vrcp.pop %v1715
    %v1717 = vmul.f32 1.0, %v1716
    %v1718 = vtanh.pop %v1703
    %v1719 = vmul.f32 %v1717, %v1718
    %v1720 = vadd.f32 %v1711, %v1719
    %v1721 = vxor.u32 %v1704, 2147483648
    %v1722 = vmul.f32 %v1721, 1.442695
    %v1723 = vpow.pop %v1722
    %v1724 = vadd.f32 %v1723, 1.0
    %v1725 = vrcp.pop %v1724
    %v1726 = vmul.f32 1.0, %v1725
    %v1727 = vtanh.pop %v1720
    %v1728 = vmul.f32 %v1726, %v1727
    %v1729 = vpack.c.bf16 %v1728, %v1728
    %v1730 = vld [vmem:[#allocation6] sm:$0xf]
    %v1731 = vld [vmem:[#allocation6 + $0x4] sm:$0xf]
    %v1732 = vld [vmem:[#allocation6 + $0x8] sm:$0xf]
    %v1733 = vld [vmem:[#allocation6 + $0xc] sm:$0xf]
    %v1734 = vld [vmem:[#allocation6 + $0x10] sm:$0xf]
    %v1735 = vld [vmem:[#allocation6 + $0x14] sm:$0xf]
    %v1736 = vld [vmem:[#allocation6 + $0x18] sm:$0xf]
    %v1737 = vld [vmem:[#allocation6 + $0x1c] sm:$0xf]
    %v1738 = vld [vmem:[#allocation6 + $0x20] sm:$0xf]
    %v1739 = vld [vmem:[#allocation6 + $0x24] sm:$0xf]
    %v1740 = vld [vmem:[#allocation6 + $0x28] sm:$0xf]
    %v1741 = vld [vmem:[#allocation6 + $0x2c] sm:$0xf]
    %v1742 = vld [vmem:[#allocation6 + $0x30] sm:$0xf]
    %v1743 = vld [vmem:[#allocation6 + $0x34] sm:$0xf]
    %v1744 = vld [vmem:[#allocation6 + $0x38] sm:$0xf]
    %v1745 = vld [vmem:[#allocation6 + $0x3c] sm:$0xf]
    %v1746 = vld [vmem:[#allocation6 + $0x40] sm:$0xf]
    %v1747 = vld [vmem:[#allocation6 + $0x44] sm:$0xf]
    %v1748 = vld [vmem:[#allocation6 + $0x48] sm:$0xf]
    %v1749 = vld [vmem:[#allocation6 + $0x4c] sm:$0xf]
    %v1750 = vld [vmem:[#allocation6 + $0x50] sm:$0xf]
    %v1751 = vld [vmem:[#allocation6 + $0x54] sm:$0xf]
    %v1752 = vld [vmem:[#allocation6 + $0x58] sm:$0xf]
    %v1753 = vld [vmem:[#allocation6 + $0x5c] sm:$0xf]
    %v1754 = vld [vmem:[#allocation6 + $0x60] sm:$0xf]
    %v1755 = vld [vmem:[#allocation6 + $0x64] sm:$0xf]
    %v1756 = vld [vmem:[#allocation6 + $0x68] sm:$0xf]
    %v1757 = vld [vmem:[#allocation6 + $0x6c] sm:$0xf]
    %v1758 = vld [vmem:[#allocation6 + $0x70] sm:$0xf]
    %v1759 = vld [vmem:[#allocation6 + $0x74] sm:$0xf]
    %v1760 = vld [vmem:[#allocation6 + $0x78] sm:$0xf]
    %v1761 = vld [vmem:[#allocation6 + $0x7c] sm:$0xf]
    %v1762 = vld [vmem:[#allocation7 + $0x4] ss:$0 sm:$0xff]
    %v1795 = vunpack.c.l.b16 %v1730
    %v1796 = vunpack.c.l.b16 %v1731
    %v1797 = vunpack.c.l.b16 %v1732
    %v1798 = vunpack.c.l.b16 %v1733
    %v1799 = vunpack.c.l.b16 %v1734
    %v1800 = vunpack.c.l.b16 %v1735
    %v1801 = vunpack.c.l.b16 %v1736
    %v1802 = vunpack.c.l.b16 %v1737
    %v1803 = vunpack.c.l.b16 %v1738
    %v1804 = vunpack.c.l.b16 %v1739
    %v1805 = vunpack.c.l.b16 %v1740
    %v1806 = vunpack.c.l.b16 %v1741
    %v1807 = vunpack.c.l.b16 %v1742
    %v1808 = vunpack.c.l.b16 %v1743
    %v1809 = vunpack.c.l.b16 %v1744
    %v1810 = vunpack.c.l.b16 %v1745
    %v1811 = vunpack.c.l.b16 %v1746
    %v1812 = vunpack.c.l.b16 %v1747
    %v1813 = vunpack.c.l.b16 %v1748
    %v1814 = vunpack.c.l.b16 %v1749
    %v1815 = vunpack.c.l.b16 %v1750
    %v1816 = vunpack.c.l.b16 %v1751
    %v1817 = vunpack.c.l.b16 %v1752
    %v1818 = vunpack.c.l.b16 %v1753
    %v1819 = vunpack.c.l.b16 %v1754
    %v1820 = vunpack.c.l.b16 %v1755
    %v1821 = vunpack.c.l.b16 %v1756
    %v1822 = vunpack.c.l.b16 %v1757
    %v1823 = vunpack.c.l.b16 %v1758
    %v1824 = vunpack.c.l.b16 %v1759
    %v1825 = vunpack.c.l.b16 %v1760
    %v1826 = vunpack.c.l.b16 %v1761
    %v1827 = vpack.c.b16 %v1796, %v1795
    %v1828 = vpack.c.b16 %v1798, %v1797
    %v1829 = vpack.c.b16 %v1800, %v1799
    %v1830 = vpack.c.b16 %v1802, %v1801
    %v1831 = vpack.c.b16 %v1804, %v1803
    %v1832 = vpack.c.b16 %v1806, %v1805
    %v1833 = vpack.c.b16 %v1808, %v1807
    %v1834 = vpack.c.b16 %v1810, %v1809
    %v1835 = vpack.c.b16 %v1812, %v1811
    %v1836 = vpack.c.b16 %v1814, %v1813
    %v1837 = vpack.c.b16 %v1816, %v1815
    %v1838 = vpack.c.b16 %v1818, %v1817
    %v1839 = vpack.c.b16 %v1820, %v1819
    %v1840 = vpack.c.b16 %v1822, %v1821
    %v1841 = vpack.c.b16 %v1824, %v1823
    %v1842 = vpack.c.b16 %v1826, %v1825
    %1859 = vmatprep.subr.bf16.mxu0 0
    %1860 = vmatpush1.bf16.msra.mxu0 %v1834
    %1861 = vmatprep.subr.bf16.mxu0 0
    %1862 = vmatpush1.bf16.msra.mxu0 %v1833
    %1863 = vmatprep.subr.bf16.mxu0 0
    %1864 = vmatpush1.bf16.msra.mxu0 %v1832
    %1865 = vmatprep.subr.bf16.mxu0 0
    %1866 = vmatpush1.bf16.msra.mxu0 %v1831
    %1867 = vmatprep.subr.bf16.mxu0 0
    %1868 = vmatpush1.bf16.msra.mxu0 %v1830
    %1869 = vmatprep.subr.bf16.mxu0 0
    %1870 = vmatpush1.bf16.msra.mxu0 %v1829
    %1871 = vmatprep.subr.bf16.mxu0 0
    %1872 = vmatpush1.bf16.msra.mxu0 %v1828
    %1873 = vmatprep.subr.bf16.mxu0 0
    %1874 = vmatpush1.bf16.msra.mxu0 %v1827
    %1875 = vmatprep.subr.bf16.mxu0 0
    %1876 = vmatpush2.bf16.msra.mxu0 %v1842
    %1877 = vmatprep.subr.bf16.mxu0 0
    %1878 = vmatpush2.bf16.msra.mxu0 %v1841
    %1879 = vmatprep.subr.bf16.mxu0 0
    %1880 = vmatpush2.bf16.msra.mxu0 %v1840
    %1881 = vmatprep.subr.bf16.mxu0 0
    %1882 = vmatpush2.bf16.msra.mxu0 %v1839
    %1883 = vmatprep.subr.bf16.mxu0 0
    %1884 = vmatpush2.bf16.msra.mxu0 %v1838
    %1885 = vmatprep.subr.bf16.mxu0 0
    %1886 = vmatpush2.bf16.msra.mxu0 %v1837
    %1887 = vmatprep.subr.bf16.mxu0 0
    %1888 = vmatpush2.bf16.msra.mxu0 %v1836
    %1889 = vmatprep.subr.bf16.mxu0 0
    %1890 = vmatpush2.bf16.msra.mxu0 %v1835
    %1891 = vmatprep.mubr.bf16.mxu0 %v1729
    %1892 = vmatmul.mubr.bf16.gmra.mxu0 %v1454
    %v1893 = vpop.f32.mrf.mxu0
    %v1894 = vadd.f32 %v1762, %v1893
    %v1895 = vpop.f32.mrf.mxu0
    %v1896 = vpop.f32.mrf.mxu0
    %v1897 = vpop.f32.mrf.mxu0
    %1898 = vdwg.mxu0
    %v1899 = vmax.f32 %v1894, 0.0
    %v1900 = vld [vmem:[#allocation6 + $0x80] sm:$0xf]
    %v1901 = vld [vmem:[#allocation6 + $0x84] sm:$0xf]
    %v1902 = vld [vmem:[#allocation6 + $0x88] sm:$0xf]
    %v1903 = vld [vmem:[#allocation6 + $0x8c] sm:$0xf]
    %v1904 = vld [vmem:[#allocation6 + $0x90] sm:$0xf]
    %v1905 = vld [vmem:[#allocation6 + $0x94] sm:$0xf]
    %v1906 = vld [vmem:[#allocation6 + $0x98] sm:$0xf]
    %v1907 = vld [vmem:[#allocation6 + $0x9c] sm:$0xf]
    %v1908 = vld [vmem:[#allocation6 + $0xa0] sm:$0xf]
    %v1909 = vld [vmem:[#allocation6 + $0xa4] sm:$0xf]
    %v1910 = vld [vmem:[#allocation6 + $0xa8] sm:$0xf]
    %v1911 = vld [vmem:[#allocation6 + $0xac] sm:$0xf]
    %v1912 = vld [vmem:[#allocation6 + $0xb0] sm:$0xf]
    %v1913 = vld [vmem:[#allocation6 + $0xb4] sm:$0xf]
    %v1914 = vld [vmem:[#allocation6 + $0xb8] sm:$0xf]
    %v1915 = vld [vmem:[#allocation6 + $0xbc] sm:$0xf]
    %v1916 = vpack.c.bf16 %v1899, %v1899
    %v1917 = vld [vmem:[#allocation7 + $0x5] ss:$0 sm:$0xff]
    %v1934 = vunpack.c.l.b16 %v1900
    %v1935 = vunpack.c.l.b16 %v1901
    %v1936 = vunpack.c.l.b16 %v1902
    %v1937 = vunpack.c.l.b16 %v1903
    %v1938 = vunpack.c.l.b16 %v1904
    %v1939 = vunpack.c.l.b16 %v1905
    %v1940 = vunpack.c.l.b16 %v1906
    %v1941 = vunpack.c.l.b16 %v1907
    %v1942 = vunpack.c.l.b16 %v1908
    %v1943 = vunpack.c.l.b16 %v1909
    %v1944 = vunpack.c.l.b16 %v1910
    %v1945 = vunpack.c.l.b16 %v1911
    %v1946 = vunpack.c.l.b16 %v1912
    %v1947 = vunpack.c.l.b16 %v1913
    %v1948 = vunpack.c.l.b16 %v1914
    %v1949 = vunpack.c.l.b16 %v1915
    %v1950 = vpack.c.b16 %v1935, %v1934
    %v1951 = vpack.c.b16 %v1937, %v1936
    %v1952 = vpack.c.b16 %v1939, %v1938
    %v1953 = vpack.c.b16 %v1941, %v1940
    %v1954 = vpack.c.b16 %v1943, %v1942
    %v1955 = vpack.c.b16 %v1945, %v1944
    %v1956 = vpack.c.b16 %v1947, %v1946
    %v1957 = vpack.c.b16 %v1949, %v1948
    %1966 = vmatprep.subr.bf16.mxu0 0
    %1967 = vmatpush1.bf16.msra.mxu0 %v1957
    %1968 = vmatprep.subr.bf16.mxu0 0
    %1969 = vmatpush1.bf16.msra.mxu0 %v1956
    %1970 = vmatprep.subr.bf16.mxu0 0
    %1971 = vmatpush1.bf16.msra.mxu0 %v1955
    %1972 = vmatprep.subr.bf16.mxu0 0
    %1973 = vmatpush1.bf16.msra.mxu0 %v1954
    %1974 = vmatprep.subr.bf16.mxu0 0
    %1975 = vmatpush1.bf16.msra.mxu0 %v1953
    %1976 = vmatprep.subr.bf16.mxu0 0
    %1977 = vmatpush1.bf16.msra.mxu0 %v1952
    %1978 = vmatprep.subr.bf16.mxu0 0
    %1979 = vmatpush1.bf16.msra.mxu0 %v1951
    %1980 = vmatprep.subr.bf16.mxu0 0
    %1981 = vmatpush1.bf16.msra.mxu0 %v1950
    %1982 = vmatprep.subr.bf16.mxu0 0
    %1983 = vmatpush2.bf16.msra.mxu0 0
    %1984 = vmatprep.subr.bf16.mxu0 0
    %1985 = vmatpush2.bf16.msra.mxu0 0
    %1986 = vmatprep.subr.bf16.mxu0 0
    %1987 = vmatpush2.bf16.msra.mxu0 0
    %1988 = vmatprep.subr.bf16.mxu0 0
    %1989 = vmatpush2.bf16.msra.mxu0 0
    %1990 = vmatprep.subr.bf16.mxu0 0
    %1991 = vmatpush2.bf16.msra.mxu0 0
    %1992 = vmatprep.subr.bf16.mxu0 0
    %1993 = vmatpush2.bf16.msra.mxu0 0
    %1994 = vmatprep.subr.bf16.mxu0 0
    %1995 = vmatpush2.bf16.msra.mxu0 0
    %1996 = vmatprep.subr.bf16.mxu0 0
    %1997 = vmatpush2.bf16.msra.mxu0 0
    %1998 = vmatprep.mubr.bf16.mxu0 0
    %1999 = vmatmul.mubr.bf16.gmra.mxu0 %v1916
    %v2000 = vpop.f32.mrf.mxu0
    %v2001 = vadd.f32 %v1917, %v2000
    %v2002 = vpop.f32.mrf.mxu0
    %v2003 = vpop.f32.mrf.mxu0
    %v2004 = vpop.f32.mrf.mxu0
    %2005 = vdwg.mxu0
    %v2006 = vmax.f32 %v2001, 0.0
    %v2007 = vld [vmem:[#allocation6 + $0xc0] sm:$0xf]
    %v2008 = vld [vmem:[#allocation6 + $0xc4] sm:$0xf]
    %v2009 = vld [vmem:[#allocation6 + $0xc8] sm:$0xf]
    %v2010 = vld [vmem:[#allocation6 + $0xcc] sm:$0xf]
    %v2011 = vld [vmem:[#allocation6 + $0xd0] sm:$0xf]
    %v2012 = vld [vmem:[#allocation6 + $0xd4] sm:$0xf]
    %v2013 = vld [vmem:[#allocation6 + $0xd8] sm:$0xf]
    %v2014 = vld [vmem:[#allocation6 + $0xdc] sm:$0xf]
    %v2015 = vld [vmem:[#allocation6 + $0xe0] sm:$0xf]
    %v2016 = vld [vmem:[#allocation6 + $0xe4] sm:$0xf]
    %v2017 = vld [vmem:[#allocation6 + $0xe8] sm:$0xf]
    %v2018 = vld [vmem:[#allocation6 + $0xec] sm:$0xf]
    %v2019 = vld [vmem:[#allocation6 + $0xf0] sm:$0xf]
    %v2020 = vld [vmem:[#allocation6 + $0xf4] sm:$0xf]
    %v2021 = vld [vmem:[#allocation6 + $0xf8] sm:$0xf]
    %v2022 = vld [vmem:[#allocation6 + $0xfc] sm:$0xf]
    %v2023 = vpack.c.bf16 %v2006, %v2006
    %v2024 = vld [vmem:[#allocation7 + $0x6] ss:$0 sm:$0xff]
    %v2041 = vunpack.c.l.b16 %v2007
    %v2042 = vunpack.c.l.b16 %v2008
    %v2043 = vunpack.c.l.b16 %v2009
    %v2044 = vunpack.c.l.b16 %v2010
    %v2045 = vunpack.c.l.b16 %v2011
    %v2046 = vunpack.c.l.b16 %v2012
    %v2047 = vunpack.c.l.b16 %v2013
    %v2048 = vunpack.c.l.b16 %v2014
    %v2049 = vunpack.c.l.b16 %v2015
    %v2050 = vunpack.c.l.b16 %v2016
    %v2051 = vunpack.c.l.b16 %v2017
    %v2052 = vunpack.c.l.b16 %v2018
    %v2053 = vunpack.c.l.b16 %v2019
    %v2054 = vunpack.c.l.b16 %v2020
    %v2055 = vunpack.c.l.b16 %v2021
    %v2056 = vunpack.c.l.b16 %v2022
    %v2057 = vpack.c.b16 %v2042, %v2041
    %v2058 = vpack.c.b16 %v2044, %v2043
    %v2059 = vpack.c.b16 %v2046, %v2045
    %v2060 = vpack.c.b16 %v2048, %v2047
    %v2061 = vpack.c.b16 %v2050, %v2049
    %v2062 = vpack.c.b16 %v2052, %v2051
    %v2063 = vpack.c.b16 %v2054, %v2053
    %v2064 = vpack.c.b16 %v2056, %v2055
    %2073 = vmatprep.subr.bf16.mxu0 0
    %2074 = vmatpush1.bf16.msra.mxu0 %v2064
    %2075 = vmatprep.subr.bf16.mxu0 0
    %2076 = vmatpush1.bf16.msra.mxu0 %v2063
    %2077 = vmatprep.subr.bf16.mxu0 0
    %2078 = vmatpush1.bf16.msra.mxu0 %v2062
    %2079 = vmatprep.subr.bf16.mxu0 0
    %2080 = vmatpush1.bf16.msra.mxu0 %v2061
    %2081 = vmatprep.subr.bf16.mxu0 0
    %2082 = vmatpush1.bf16.msra.mxu0 %v2060
    %2083 = vmatprep.subr.bf16.mxu0 0
    %2084 = vmatpush1.bf16.msra.mxu0 %v2059
    %2085 = vmatprep.subr.bf16.mxu0 0
    %2086 = vmatpush1.bf16.msra.mxu0 %v2058
    %2087 = vmatprep.subr.bf16.mxu0 0
    %2088 = vmatpush1.bf16.msra.mxu0 %v2057
    %2089 = vmatprep.subr.bf16.mxu0 0
    %2090 = vmatpush2.bf16.msra.mxu0 0
    %2091 = vmatprep.subr.bf16.mxu0 0
    %2092 = vmatpush2.bf16.msra.mxu0 0
    %2093 = vmatprep.subr.bf16.mxu0 0
    %2094 = vmatpush2.bf16.msra.mxu0 0
    %2095 = vmatprep.subr.bf16.mxu0 0
    %2096 = vmatpush2.bf16.msra.mxu0 0
    %2097 = vmatprep.subr.bf16.mxu0 0
    %2098 = vmatpush2.bf16.msra.mxu0 0
    %2099 = vmatprep.subr.bf16.mxu0 0
    %2100 = vmatpush2.bf16.msra.mxu0 0
    %2101 = vmatprep.subr.bf16.mxu0 0
    %2102 = vmatpush2.bf16.msra.mxu0 0
    %2103 = vmatprep.subr.bf16.mxu0 0
    %2104 = vmatpush2.bf16.msra.mxu0 0
    %2105 = vmatprep.mubr.bf16.mxu0 0
    %2106 = vmatmul.mubr.bf16.gmra.mxu0 %v2023
    %v2107 = vpop.f32.mrf.mxu0
    %v2108 = vadd.f32 %v2024, %v2107
    %v2109 = vpop.f32.mrf.mxu0
    %v2110 = vpop.f32.mrf.mxu0
    %v2111 = vpop.f32.mrf.mxu0
    %2112 = vdwg.mxu0
    %v2113 = vxor.u32 %v2108, 2147483648
    %v2114 = vmul.f32 %v2113, 1.442695
    %v2115 = vpow.pop %v2114
    %v2116 = vadd.f32 %v2115, 1.0
    %v2117 = vrcp.pop %v2116
    %v2118 = vmul.f32 1.0, %v2117
    %2119 = vst [vmem:[%s6] sm:$0xff] %v2118
    // Predicated region
    $region42: #{physical_lstm2_pallas.1} parent=1 // pred_check
      _
    $region43: #{physical_lstm2_pallas.1} parent=1 // pred_check_branch
      %2121 = sbr.rel (0) target = $region45
    $region44: #{physical_lstm2_pallas.1} parent=1 // pred_region
      _
    $region45: #{physical_lstm2_pallas.1} parent=1 // pred_fallthru
      _
    // Predicated region
    $region46: #{physical_lstm2_pallas.1} parent=1 // pred_check
      _
    $region47: #{physical_lstm2_pallas.1} parent=1 // pred_check_branch
      %2123 = sbr.rel (0) target = $region49
    $region48: #{physical_lstm2_pallas.1} parent=1 // pred_region
      _
    $region49: #{physical_lstm2_pallas.1} parent=1 // pred_fallthru
      _
    %2124 = vsyncpa [#allocation3], 1
    %2125 = vsyncpa [#allocation5], 1
    %2126 = vsyncpa [#allocation8], 1

</llo_original>
